<compile_context>
chip_gen: v7x
topology: tpu7x:2x2x1
jax: 0.10.0
libtpu: 0.0.40
codegen_flags: <defaults>
</compile_context>

<pallas_src>
import jax
import jax.numpy as jnp
from jax.experimental import pallas as pl
from jax.experimental.pallas import tpu as pltpu

EPS = 1e-5  # PyTorch InstanceNorm2d default eps


# ----------------------------- kernel helpers ------------------------------

def _shift_down(v):
    # out[h] = v[h-1], row 0 = 0   (ky = 0 tap of the 3x3 window)
    return jnp.concatenate([jnp.zeros_like(v[:1]), v[:-1]], axis=0)


def _shift_up(v):
    # out[h] = v[h+1], last row = 0   (ky = 2 tap)
    return jnp.concatenate([v[1:], jnp.zeros_like(v[:1])], axis=0)


def _conv3x3_dense(xb, wb_ref):
    """3x3 'SAME' conv on a lane-dense (H, W*C) bf16 slab.
    wb_ref: (3, W*C, W*C) bf16 banded weights (kx taps + zero pad folded in).
    Three accumulated MXU dots (K = W*C each), f32 accumulation."""
    y = jnp.dot(_shift_down(xb), wb_ref[0], preferred_element_type=jnp.float32)
    y += jnp.dot(xb, wb_ref[1], preferred_element_type=jnp.float32)
    y += jnp.dot(_shift_up(xb), wb_ref[2], preferred_element_type=jnp.float32)
    return y


def _instance_norm_dense(y, avg, g, b):
    """Two-pass instance norm on a lane-dense (H, W*C) f32 slab.
    `avg` = tile(eye(C), (W, W)) / W : dot(., avg) averages the W lane-groups
    of each channel; the row-mean over H completes the per-channel statistic.
    Biased variance, affine -- matches PyTorch's training-mode forward."""
    m = jnp.mean(jnp.dot(y, avg, preferred_element_type=jnp.float32),
                 axis=0, keepdims=True)                      # (1, W*C)
    d = y - m
    v = jnp.mean(jnp.dot(d * d, avg, preferred_element_type=jnp.float32),
                 axis=0, keepdims=True)                      # (1, W*C)
    return d * (jax.lax.rsqrt(v + EPS) * g) + b


def residual_block_kernel(x_ref, wb1_ref, g1_ref, b1_ref,
                          wb2_ref, g2_ref, b2_ref, avg_ref, o_ref):
    x = x_ref[0].astype(jnp.float32)                         # (H, W*C) f32
    avg = avg_ref[...]

    # conv1 (bf16 MXU) -> instance norm 1 (f32) -> ReLU
    h = _conv3x3_dense(x.astype(jnp.bfloat16), wb1_ref)
    h = jnp.maximum(_instance_norm_dense(h, avg, g1_ref[...], b1_ref[...]), 0.0)

    # conv2 (bf16 MXU) -> instance norm 2 (f32)
    z = _conv3x3_dense(h.astype(jnp.bfloat16), wb2_ref)
    z = _instance_norm_dense(z, avg, g2_ref[...], b2_ref[...])

    # residual add (exact f32 x, lane-dense unmasked store)
    o_ref[0] = (x + z).astype(o_ref.dtype)


# --------------------------------- wrapper ---------------------------------

def _banded_conv_weight(w_hwio, width):
    """(3, 3, C, C) HWIO -> (3, W*C, W*C) banded matrices acting on a
    lane-dense (H, W*C) slab.  Entry [ky][w'*C+ci, w*C+co] = w[ky, w'-w+1, ci, co]
    when |w'-w| <= 1, else 0 (the zeros realize the left/right 'SAME' pad)."""
    C = w_hwio.shape[2]
    pos = jnp.arange(width)
    bands = []
    for ky in range(3):
        acc = jnp.zeros((width, C, width, C), jnp.float32)
        for kx in range(3):
            sel = (pos[:, None] == pos[None, :] + (kx - 1)).astype(jnp.float32)
            acc = acc + jnp.einsum('pq,ij->piqj', sel,
                                   w_hwio[ky, kx].astype(jnp.float32))
        bands.append(acc.reshape(width * C, width * C))
    return jnp.stack(bands, axis=0)


def residual_block_nhwc(x_nhwc, params):
    """NHWC-native entry point (no layout transposes).  params = (w1, g1, b1,
    w2, g2, b2); conv weights in HWIO (3, 3, C, C).  A PyTorch
    (C_out, C_in, 3, 3) weight maps via w.transpose(2, 3, 1, 0)."""
    w1, g1, b1, w2, g2, b2 = params
    B, H, W, C = x_nhwc.shape
    WC = W * C

    x2 = x_nhwc.reshape(B, H, WC).astype(jnp.float32)    # free (metadata) reshape

    wb1 = _banded_conv_weight(w1, W).astype(jnp.bfloat16)
    wb2 = _banded_conv_weight(w2, W).astype(jnp.bfloat16)
    # lane index = w*C + c  ->  per-channel affine params tiled W times
    g1d = jnp.tile(g1.astype(jnp.float32), W).reshape(1, WC)
    b1d = jnp.tile(b1.astype(jnp.float32), W).reshape(1, WC)
    g2d = jnp.tile(g2.astype(jnp.float32), W).reshape(1, WC)
    b2d = jnp.tile(b2.astype(jnp.float32), W).reshape(1, WC)
    avg = jnp.tile(jnp.eye(C, dtype=jnp.float32), (W, W)) / W      # (WC, WC)

    # Real per-step VMEM footprint + headroom, capped per TPU generation.
    est = (2 * 2 * H * WC * 4                 # x / out blocks, double-buffered
           + 2 * 2 * 3 * WC * WC * 2          # two banded bf16 conv weights
           + 2 * (WC * WC * 4 + 4 * WC * 4)   # avg matrix + affine vectors
           + 12 * H * WC * 4)                 # live f32 activation temps
    try:
        cap = pltpu.get_tpu_info().vmem_capacity_bytes
    except Exception:
        cap = 128 * 1024 * 1024
    vmem_limit = int(min(0.85 * cap, est + (4 << 20)))

    out = pl.pallas_call(
        residual_block_kernel,
        out_shape=jax.ShapeDtypeStruct((B, H, WC), jnp.float32),
        grid_spec=pltpu.PrefetchScalarGridSpec(
            num_scalar_prefetch=0,
            grid=(B,),
            in_specs=[
                pl.BlockSpec((1, H, WC), lambda b: (b, 0, 0)),     # x
                pl.BlockSpec((3, WC, WC), lambda b: (0, 0, 0)),    # wb1
                pl.BlockSpec((1, WC), lambda b: (0, 0)),           # g1
                pl.BlockSpec((1, WC), lambda b: (0, 0)),           # b1
                pl.BlockSpec((3, WC, WC), lambda b: (0, 0, 0)),    # wb2
                pl.BlockSpec((1, WC), lambda b: (0, 0)),           # g2
                pl.BlockSpec((1, WC), lambda b: (0, 0)),           # b2
                pl.BlockSpec((WC, WC), lambda b: (0, 0)),          # avg matrix
            ],
            out_specs=pl.BlockSpec((1, H, WC), lambda b: (b, 0, 0)),
        ),
        compiler_params=pltpu.CompilerParams(
            dimension_semantics=("parallel",),
            vmem_limit_bytes=vmem_limit),
    )(x2, wb1, g1d, b1d, wb2, g2d, b2d, avg)

    return out.reshape(B, H, W, C).astype(x_nhwc.dtype)


@jax.jit
def residual_block(x_nchw, params):
    """NCHW adapter matching the PyTorch module interface.  Production models
    should stay NHWC across residual blocks and call residual_block_nhwc
    directly (saves two full HBM transpose round-trips per block)."""
    x = jnp.transpose(x_nchw, (0, 2, 3, 1))          # NCHW -> NHWC
    y = residual_block_nhwc(x, params)
    return jnp.transpose(y, (0, 3, 1, 2))            # NHWC -> NCHW


# ------------------------------- reference ---------------------------------

def reference(x_nchw, params):
    """Pure-JAX f32 reference matching the PyTorch forward
    (training-mode InstanceNorm, biased variance)."""
    w1, g1, b1, w2, g2, b2 = params
    x = jnp.transpose(x_nchw, (0, 2, 3, 1)).astype(jnp.float32)

    def conv(y, w):
        return jax.lax.conv_general_dilated(
            y, w, window_strides=(1, 1), padding="SAME",
            dimension_numbers=("NHWC", "HWIO", "NHWC"))

    def inorm(y, g, b):
        m = jnp.mean(y, axis=(1, 2), keepdims=True)
        v = jnp.mean((y - m) ** 2, axis=(1, 2), keepdims=True)
        return ((y - m) * jax.lax.rsqrt(v + EPS)
                * g.reshape(1, 1, 1, -1) + b.reshape(1, 1, 1, -1))

    h = jnp.maximum(inorm(conv(x, w1), g1, b1), 0.0)
    h = inorm(conv(h, w2), g2, b2)
    return jnp.transpose(x + h, (0, 3, 1, 2))


if __name__ == "__main__":
    B, DIM, H, W = 2, 8, 16, 16      # W*C = 128 -> fully lane-dense slabs
    key = jax.random.PRNGKey(0)
    kx_, k1, k2, kg1, kb1, kg2, kb2 = jax.random.split(key, 7)

    x = jax.random.normal(kx_, (B, DIM, H, W), jnp.float32)

    # Conv weights in HWIO (3, 3, C_in, C_out); a PyTorch (C_out, C_in, 3, 3)
    # weight would be w.transpose(2, 3, 1, 0).
    w1 = 0.1 * jax.random.normal(k1, (3, 3, DIM, DIM), jnp.float32)
    w2 = 0.1 * jax.random.normal(k2, (3, 3, DIM, DIM), jnp.float32)
    # InstanceNorm affine params (perturbed from the 1/0 defaults so the
    # affine path is exercised).
    g1 = 1.0 + 0.1 * jax.random.normal(kg1, (DIM,), jnp.float32)
    b1 = 0.1 * jax.random.normal(kb1, (DIM,), jnp.float32)
    g2 = 1.0 + 0.1 * jax.random.normal(kg2, (DIM,), jnp.float32)
    b2 = 0.1 * jax.random.normal(kb2, (DIM,), jnp.float32)

    params = (w1, g1, b1, w2, g2, b2)

    out = jax.block_until_ready(residual_block(x, params))
    ref = jax.block_until_ready(reference(x, params))

    assert out.shape == (B, DIM, H, W)
    err = float(jnp.max(jnp.abs(out - ref)))
    # Tolerance loosened vs the all-f32 reference because the conv matmuls run
    # with bf16 MXU operands (per the perf review); real structural bugs give
    # O(1) errors, far above this threshold.
    assert err < 6e-2, f"max abs err {err}"

    print("KERNEL_OK")
</pallas_src>

<mosaic_0001>
module attributes {stable_mosaic.version = 11 : i64} {
  func.func @residual_block_kernel(%arg0: i32, %arg1: memref<1x16x128xf32, #tpu.memory_space<vmem>>, %arg2: memref<3x128x128xbf16, #tpu.memory_space<vmem>>, %arg3: memref<1x128xf32, #tpu.memory_space<vmem>>, %arg4: memref<1x128xf32, #tpu.memory_space<vmem>>, %arg5: memref<3x128x128xbf16, #tpu.memory_space<vmem>>, %arg6: memref<1x128xf32, #tpu.memory_space<vmem>>, %arg7: memref<1x128xf32, #tpu.memory_space<vmem>>, %arg8: memref<128x128xf32, #tpu.memory_space<vmem>>, %arg9: memref<1x16x128xf32, #tpu.memory_space<vmem>>) attributes {dimension_semantics = [#tpu.dimension_semantics<parallel>], iteration_bounds = array<i64: 2>, scalar_prefetch = 0 : i64, scratch_operands = 0 : i64, tpu.core_type = #tpu.core_type<tc>, window_params = [{transform_indices = @transform_0, window_bounds = array<i64: 1, 16, 128>}, {pipeline_mode = #tpu.pipeline_mode<synchronous>, transform_indices = @transform_1, window_bounds = array<i64: 3, 128, 128>}, {pipeline_mode = #tpu.pipeline_mode<synchronous>, transform_indices = @transform_2, window_bounds = array<i64: 1, 128>}, {pipeline_mode = #tpu.pipeline_mode<synchronous>, transform_indices = @transform_3, window_bounds = array<i64: 1, 128>}, {pipeline_mode = #tpu.pipeline_mode<synchronous>, transform_indices = @transform_4, window_bounds = array<i64: 3, 128, 128>}, {pipeline_mode = #tpu.pipeline_mode<synchronous>, transform_indices = @transform_5, window_bounds = array<i64: 1, 128>}, {pipeline_mode = #tpu.pipeline_mode<synchronous>, transform_indices = @transform_6, window_bounds = array<i64: 1, 128>}, {pipeline_mode = #tpu.pipeline_mode<synchronous>, transform_indices = @transform_7, window_bounds = array<i64: 128, 128>}, {transform_indices = @transform_8, window_bounds = array<i64: 1, 16, 128>}]} {
    %c0 = arith.constant 0 : index
    %c0_0 = arith.constant 0 : index
    %c0_1 = arith.constant 0 : index
    %0 = vector.load %arg1[%c0, %c0_0, %c0_1] : memref<1x16x128xf32, #tpu.memory_space<vmem>>, vector<1x16x128xf32>
    %1 = vector.shape_cast %0 : vector<1x16x128xf32> to vector<16x128xf32>
    %c0_2 = arith.constant 0 : index
    %c0_3 = arith.constant 0 : index
    %2 = vector.load %arg8[%c0_2, %c0_3] : memref<128x128xf32, #tpu.memory_space<vmem>>, vector<128x128xf32>
    %3 = arith.truncf %1 : vector<16x128xf32> to vector<16x128xbf16>
    %cst = arith.constant 0.000000e+00 : bf16
    %4 = vector.broadcast %cst : bf16 to vector<1x128xbf16>
    %5 = vector.extract_strided_slice %3 {offsets = [0, 0], sizes = [15, 128], strides = [1, 1]} : vector<16x128xbf16> to vector<15x128xbf16>
    %6 = tpu.concatenate %4, %5 in 0 : vector<1x128xbf16>, vector<15x128xbf16> -> vector<16x128xbf16>
    %c0_4 = arith.constant 0 : index
    %c0_5 = arith.constant 0 : index
    %c0_6 = arith.constant 0 : index
    %7 = vector.load %arg2[%c0_4, %c0_5, %c0_6] : memref<3x128x128xbf16, #tpu.memory_space<vmem>>, vector<1x128x128xbf16>
    %8 = vector.shape_cast %7 : vector<1x128x128xbf16> to vector<128x128xbf16>
    %cst_7 = arith.constant dense<0.000000e+00> : vector<16x128xf32>
    %9 = tpu.matmul %6, %8, %cst_7 {dimension_numbers = #tpu.dot_dimension_numbers<[1], [0], [0], [1], [0, 0, 1, 1], [], []>} : vector<16x128xbf16>, vector<128x128xbf16>, vector<16x128xf32> -> vector<16x128xf32>
    %c1 = arith.constant 1 : index
    %c0_8 = arith.constant 0 : index
    %c0_9 = arith.constant 0 : index
    %10 = vector.load %arg2[%c1, %c0_8, %c0_9] : memref<3x128x128xbf16, #tpu.memory_space<vmem>>, vector<1x128x128xbf16>
    %11 = vector.shape_cast %10 : vector<1x128x128xbf16> to vector<128x128xbf16>
    %cst_10 = arith.constant dense<0.000000e+00> : vector<16x128xf32>
    %12 = tpu.matmul %3, %11, %cst_10 {dimension_numbers = #tpu.dot_dimension_numbers<[1], [0], [0], [1], [0, 0, 1, 1], [], []>} : vector<16x128xbf16>, vector<128x128xbf16>, vector<16x128xf32> -> vector<16x128xf32>
    %13 = arith.addf %9, %12 : vector<16x128xf32>
    %14 = vector.extract_strided_slice %3 {offsets = [1, 0], sizes = [15, 128], strides = [1, 1]} : vector<16x128xbf16> to vector<15x128xbf16>
    %cst_11 = arith.constant 0.000000e+00 : bf16
    %15 = vector.broadcast %cst_11 : bf16 to vector<1x128xbf16>
    %16 = tpu.concatenate %14, %15 in 0 : vector<15x128xbf16>, vector<1x128xbf16> -> vector<16x128xbf16>
    %c2 = arith.constant 2 : index
    %c0_12 = arith.constant 0 : index
    %c0_13 = arith.constant 0 : index
    %17 = vector.load %arg2[%c2, %c0_12, %c0_13] : memref<3x128x128xbf16, #tpu.memory_space<vmem>>, vector<1x128x128xbf16>
    %18 = vector.shape_cast %17 : vector<1x128x128xbf16> to vector<128x128xbf16>
    %cst_14 = arith.constant dense<0.000000e+00> : vector<16x128xf32>
    %19 = tpu.matmul %16, %18, %cst_14 {dimension_numbers = #tpu.dot_dimension_numbers<[1], [0], [0], [1], [0, 0, 1, 1], [], []>} : vector<16x128xbf16>, vector<128x128xbf16>, vector<16x128xf32> -> vector<16x128xf32>
    %20 = arith.addf %13, %19 : vector<16x128xf32>
    %c0_15 = arith.constant 0 : index
    %c0_16 = arith.constant 0 : index
    %21 = vector.load %arg3[%c0_15, %c0_16] : memref<1x128xf32, #tpu.memory_space<vmem>>, vector<1x128xf32>
    %c0_17 = arith.constant 0 : index
    %c0_18 = arith.constant 0 : index
    %22 = vector.load %arg4[%c0_17, %c0_18] : memref<1x128xf32, #tpu.memory_space<vmem>>, vector<1x128xf32>
    %cst_19 = arith.constant dense<0.000000e+00> : vector<16x128xf32>
    %23 = tpu.matmul %20, %2, %cst_19 {dimension_numbers = #tpu.dot_dimension_numbers<[1], [0], [0], [1], [0, 0, 1, 1], [], []>} : vector<16x128xf32>, vector<128x128xf32>, vector<16x128xf32> -> vector<16x128xf32>
    %cst_20 = arith.constant dense<0.000000e+00> : vector<128xf32>
    %24 = vector.multi_reduction <add>, %23, %cst_20 [0] : vector<16x128xf32> to vector<128xf32>
    %25 = vector.shape_cast %24 : vector<128xf32> to vector<1x128xf32>
    %cst_21 = arith.constant 1.600000e+01 : f32
    %26 = vector.broadcast %cst_21 : f32 to vector<1x128xf32>
    %27 = arith.divf %25, %26 : vector<1x128xf32>
    %28 = vector.broadcast %27 : vector<1x128xf32> to vector<16x128xf32>
    %29 = arith.subf %20, %28 : vector<16x128xf32>
    %30 = arith.mulf %29, %29 : vector<16x128xf32>
    %cst_22 = arith.constant dense<0.000000e+00> : vector<16x128xf32>
    %31 = tpu.matmul %30, %2, %cst_22 {dimension_numbers = #tpu.dot_dimension_numbers<[1], [0], [0], [1], [0, 0, 1, 1], [], []>} : vector<16x128xf32>, vector<128x128xf32>, vector<16x128xf32> -> vector<16x128xf32>
    %cst_23 = arith.constant dense<0.000000e+00> : vector<128xf32>
    %32 = vector.multi_reduction <add>, %31, %cst_23 [0] : vector<16x128xf32> to vector<128xf32>
    %33 = vector.shape_cast %32 : vector<128xf32> to vector<1x128xf32>
    %cst_24 = arith.constant 1.600000e+01 : f32
    %34 = vector.broadcast %cst_24 : f32 to vector<1x128xf32>
    %35 = arith.divf %33, %34 : vector<1x128xf32>
    %cst_25 = arith.constant 9.99999974E-6 : f32
    %36 = vector.broadcast %cst_25 : f32 to vector<1x128xf32>
    %37 = arith.addf %35, %36 : vector<1x128xf32>
    %38 = math.rsqrt %37 : vector<1x128xf32>
    %39 = arith.mulf %38, %21 : vector<1x128xf32>
    %40 = vector.broadcast %39 : vector<1x128xf32> to vector<16x128xf32>
    %41 = arith.mulf %29, %40 : vector<16x128xf32>
    %42 = vector.broadcast %22 : vector<1x128xf32> to vector<16x128xf32>
    %43 = arith.addf %41, %42 : vector<16x128xf32>
    %cst_26 = arith.constant 0.000000e+00 : f32
    %44 = vector.broadcast %cst_26 : f32 to vector<16x128xf32>
    %45 = arith.maximumf %43, %44 : vector<16x128xf32>
    %46 = arith.truncf %45 : vector<16x128xf32> to vector<16x128xbf16>
    %cst_27 = arith.constant 0.000000e+00 : bf16
    %47 = vector.broadcast %cst_27 : bf16 to vector<1x128xbf16>
    %48 = vector.extract_strided_slice %46 {offsets = [0, 0], sizes = [15, 128], strides = [1, 1]} : vector<16x128xbf16> to vector<15x128xbf16>
    %49 = tpu.concatenate %47, %48 in 0 : vector<1x128xbf16>, vector<15x128xbf16> -> vector<16x128xbf16>
    %c0_28 = arith.constant 0 : index
    %c0_29 = arith.constant 0 : index
    %c0_30 = arith.constant 0 : index
    %50 = vector.load %arg5[%c0_28, %c0_29, %c0_30] : memref<3x128x128xbf16, #tpu.memory_space<vmem>>, vector<1x128x128xbf16>
    %51 = vector.shape_cast %50 : vector<1x128x128xbf16> to vector<128x128xbf16>
    %cst_31 = arith.constant dense<0.000000e+00> : vector<16x128xf32>
    %52 = tpu.matmul %49, %51, %cst_31 {dimension_numbers = #tpu.dot_dimension_numbers<[1], [0], [0], [1], [0, 0, 1, 1], [], []>} : vector<16x128xbf16>, vector<128x128xbf16>, vector<16x128xf32> -> vector<16x128xf32>
    %c1_32 = arith.constant 1 : index
    %c0_33 = arith.constant 0 : index
    %c0_34 = arith.constant 0 : index
    %53 = vector.load %arg5[%c1_32, %c0_33, %c0_34] : memref<3x128x128xbf16, #tpu.memory_space<vmem>>, vector<1x128x128xbf16>
    %54 = vector.shape_cast %53 : vector<1x128x128xbf16> to vector<128x128xbf16>
    %cst_35 = arith.constant dense<0.000000e+00> : vector<16x128xf32>
    %55 = tpu.matmul %46, %54, %cst_35 {dimension_numbers = #tpu.dot_dimension_numbers<[1], [0], [0], [1], [0, 0, 1, 1], [], []>} : vector<16x128xbf16>, vector<128x128xbf16>, vector<16x128xf32> -> vector<16x128xf32>
    %56 = arith.addf %52, %55 : vector<16x128xf32>
    %57 = vector.extract_strided_slice %46 {offsets = [1, 0], sizes = [15, 128], strides = [1, 1]} : vector<16x128xbf16> to vector<15x128xbf16>
    %cst_36 = arith.constant 0.000000e+00 : bf16
    %58 = vector.broadcast %cst_36 : bf16 to vector<1x128xbf16>
    %59 = tpu.concatenate %57, %58 in 0 : vector<15x128xbf16>, vector<1x128xbf16> -> vector<16x128xbf16>
    %c2_37 = arith.constant 2 : index
    %c0_38 = arith.constant 0 : index
    %c0_39 = arith.constant 0 : index
    %60 = vector.load %arg5[%c2_37, %c0_38, %c0_39] : memref<3x128x128xbf16, #tpu.memory_space<vmem>>, vector<1x128x128xbf16>
    %61 = vector.shape_cast %60 : vector<1x128x128xbf16> to vector<128x128xbf16>
    %cst_40 = arith.constant dense<0.000000e+00> : vector<16x128xf32>
    %62 = tpu.matmul %59, %61, %cst_40 {dimension_numbers = #tpu.dot_dimension_numbers<[1], [0], [0], [1], [0, 0, 1, 1], [], []>} : vector<16x128xbf16>, vector<128x128xbf16>, vector<16x128xf32> -> vector<16x128xf32>
    %63 = arith.addf %56, %62 : vector<16x128xf32>
    %c0_41 = arith.constant 0 : index
    %c0_42 = arith.constant 0 : index
    %64 = vector.load %arg6[%c0_41, %c0_42] : memref<1x128xf32, #tpu.memory_space<vmem>>, vector<1x128xf32>
    %c0_43 = arith.constant 0 : index
    %c0_44 = arith.constant 0 : index
    %65 = vector.load %arg7[%c0_43, %c0_44] : memref<1x128xf32, #tpu.memory_space<vmem>>, vector<1x128xf32>
    %cst_45 = arith.constant dense<0.000000e+00> : vector<16x128xf32>
    %66 = tpu.matmul %63, %2, %cst_45 {dimension_numbers = #tpu.dot_dimension_numbers<[1], [0], [0], [1], [0, 0, 1, 1], [], []>} : vector<16x128xf32>, vector<128x128xf32>, vector<16x128xf32> -> vector<16x128xf32>
    %cst_46 = arith.constant dense<0.000000e+00> : vector<128xf32>
    %67 = vector.multi_reduction <add>, %66, %cst_46 [0] : vector<16x128xf32> to vector<128xf32>
    %68 = vector.shape_cast %67 : vector<128xf32> to vector<1x128xf32>
    %cst_47 = arith.constant 1.600000e+01 : f32
    %69 = vector.broadcast %cst_47 : f32 to vector<1x128xf32>
    %70 = arith.divf %68, %69 : vector<1x128xf32>
    %71 = vector.broadcast %70 : vector<1x128xf32> to vector<16x128xf32>
    %72 = arith.subf %63, %71 : vector<16x128xf32>
    %73 = arith.mulf %72, %72 : vector<16x128xf32>
    %cst_48 = arith.constant dense<0.000000e+00> : vector<16x128xf32>
    %74 = tpu.matmul %73, %2, %cst_48 {dimension_numbers = #tpu.dot_dimension_numbers<[1], [0], [0], [1], [0, 0, 1, 1], [], []>} : vector<16x128xf32>, vector<128x128xf32>, vector<16x128xf32> -> vector<16x128xf32>
    %cst_49 = arith.constant dense<0.000000e+00> : vector<128xf32>
    %75 = vector.multi_reduction <add>, %74, %cst_49 [0] : vector<16x128xf32> to vector<128xf32>
    %76 = vector.shape_cast %75 : vector<128xf32> to vector<1x128xf32>
    %cst_50 = arith.constant 1.600000e+01 : f32
    %77 = vector.broadcast %cst_50 : f32 to vector<1x128xf32>
    %78 = arith.divf %76, %77 : vector<1x128xf32>
    %cst_51 = arith.constant 9.99999974E-6 : f32
    %79 = vector.broadcast %cst_51 : f32 to vector<1x128xf32>
    %80 = arith.addf %78, %79 : vector<1x128xf32>
    %81 = math.rsqrt %80 : vector<1x128xf32>
    %82 = arith.mulf %81, %64 : vector<1x128xf32>
    %83 = vector.broadcast %82 : vector<1x128xf32> to vector<16x128xf32>
    %84 = arith.mulf %72, %83 : vector<16x128xf32>
    %85 = vector.broadcast %65 : vector<1x128xf32> to vector<16x128xf32>
    %86 = arith.addf %84, %85 : vector<16x128xf32>
    %87 = arith.addf %1, %86 : vector<16x128xf32>
    %c0_52 = arith.constant 0 : index
    %c0_53 = arith.constant 0 : index
    %c0_54 = arith.constant 0 : index
    %88 = vector.load %arg9[%c0_52, %c0_53, %c0_54] : memref<1x16x128xf32, #tpu.memory_space<vmem>>, vector<1x16x128xf32>
    %89 = vector.shape_cast %88 : vector<1x16x128xf32> to vector<16x128xf32>
    %90 = vector.shape_cast %87 : vector<16x128xf32> to vector<1x16x128xf32>
    tpu.vector_store %arg9[%c0_52, %c0_53, %c0_54], %90 {strides = array<i32>} : memref<1x16x128xf32, #tpu.memory_space<vmem>>, vector<1x16x128xf32>,
    return
  }
  func.func @transform_0(%arg0: i32) -> (i32, i32, i32) {
    %c0_i32 = arith.constant 0 : i32
    %c0_i32_0 = arith.constant 0 : i32
    %c0_i32_1 = arith.constant 0 : i32
    return %arg0, %c0_i32, %c0_i32_0 : i32, i32, i32
  }
  func.func @transform_1(%arg0: i32) -> (i32, i32, i32) {
    %c0_i32 = arith.constant 0 : i32
    %c0_i32_0 = arith.constant 0 : i32
    %c0_i32_1 = arith.constant 0 : i32
    %c0_i32_2 = arith.constant 0 : i32
    return %c0_i32, %c0_i32_0, %c0_i32_1 : i32, i32, i32
  }
  func.func @transform_2(%arg0: i32) -> (i32, i32) {
    %c0_i32 = arith.constant 0 : i32
    %c0_i32_0 = arith.constant 0 : i32
    %c0_i32_1 = arith.constant 0 : i32
    return %c0_i32, %c0_i32_0 : i32, i32
  }
  func.func @transform_3(%arg0: i32) -> (i32, i32) {
    %c0_i32 = arith.constant 0 : i32
    %c0_i32_0 = arith.constant 0 : i32
    %c0_i32_1 = arith.constant 0 : i32
    return %c0_i32, %c0_i32_0 : i32, i32
  }
  func.func @transform_4(%arg0: i32) -> (i32, i32, i32) {
    %c0_i32 = arith.constant 0 : i32
    %c0_i32_0 = arith.constant 0 : i32
    %c0_i32_1 = arith.constant 0 : i32
    %c0_i32_2 = arith.constant 0 : i32
    return %c0_i32, %c0_i32_0, %c0_i32_1 : i32, i32, i32
  }
  func.func @transform_5(%arg0: i32) -> (i32, i32) {
    %c0_i32 = arith.constant 0 : i32
    %c0_i32_0 = arith.constant 0 : i32
    %c0_i32_1 = arith.constant 0 : i32
    return %c0_i32, %c0_i32_0 : i32, i32
  }
  func.func @transform_6(%arg0: i32) -> (i32, i32) {
    %c0_i32 = arith.constant 0 : i32
    %c0_i32_0 = arith.constant 0 : i32
    %c0_i32_1 = arith.constant 0 : i32
    return %c0_i32, %c0_i32_0 : i32, i32
  }
  func.func @transform_7(%arg0: i32) -> (i32, i32) {
    %c0_i32 = arith.constant 0 : i32
    %c0_i32_0 = arith.constant 0 : i32
    %c0_i32_1 = arith.constant 0 : i32
    return %c0_i32, %c0_i32_0 : i32, i32
  }
  func.func @transform_8(%arg0: i32) -> (i32, i32, i32) {
    %c0_i32 = arith.constant 0 : i32
    %c0_i32_0 = arith.constant 0 : i32
    %c0_i32_1 = arith.constant 0 : i32
    return %arg0, %c0_i32, %c0_i32_0 : i32, i32, i32
  }
}

</mosaic_0001>

<llo_original>
// kernel: tile.28
$region0: #{tile.28}
  #allocation0 [shape = 's32[1]{0}', space=sflag, size = 0x4, scoped, tag = 'scoped memory for tile.28']
  %s0 = inlined_call_operand.vmem [shape: f32[8], index: 0, kind: input, shape index: {}]
  %s1 = inlined_call_operand.vmem [shape: f32[16,8], index: 1, kind: output, shape index: {}]
  // Predicated region
  $region2: #{tile.28} parent=0 // pred_check
    _
  $region3: #{tile.28} parent=0 // pred_check_branch
    %3 = sbr.rel (0) target = $region5
  $region4: #{tile.28} parent=0 // pred_region
    _
  $region5: #{tile.28} parent=0 // pred_fallthru
    _
  %v4 = vld [vmem:[%s0] ss:$0 sm:$0xff]
  %5 = vst [vmem:[%s1] sm:$0xff] %v4
  %s6 = scalar_lea.vmem %s1, 8
  %7 = vst [vmem:[%s6] sm:$0xff] %v4

// kernel: tile.29
$region0: #{tile.29}
  %s0 = inlined_call_operand.vmem [shape: f32[16,8], index: 0, kind: input, shape index: {}]
  %s1 = inlined_call_operand.vmem [shape: f32[1,128], index: 1, kind: output, shape index: {}]
  $region1: #{tile.29} parent=0
    #allocation0 [shape = 'u8[4096]{0}', space=vmem, size = 0x1000, scoped, tag = 'scoped mem for output reshape']
    %v2 = vld [vmem:[%s0] sm:$0x1]
    %vm3 = vcmask 64512
    %4 = vst.msk [vmem:[#allocation0] sm:$0x1] %vm3, %v2
    %s5 = scalar_lea.vmem %s0, 15
    %v6 = vld [vmem:[%s5] sm:$0x1]
    %7 = vrot.lane.b32.xlu0 %v6, 120
    %v8 = vpop.permute.xlu0 %7
    %vm9 = vcmask 1048512
    %10 = vst.msk [vmem:[#allocation0] sm:$0x1] %vm9, %v8
    %s11 = scalar_lea.vmem %s0, 14
    %v12 = vld [vmem:[%s11] sm:$0x1]
    %13 = vrot.lane.b32.xlu0 %v12, 112
    %v14 = vpop.permute.xlu0 %13
    %vm15 = vcmask 982912
    %16 = vst.msk [vmem:[#allocation0] sm:$0x1] %vm15, %v14
    %s17 = scalar_lea.vmem %s0, 13
    %v18 = vld [vmem:[%s17] sm:$0x1]
    %19 = vrot.lane.b32.xlu0 %v18, 104
    %v20 = vpop.permute.xlu0 %19
    %vm21 = vcmask 917312
    %22 = vst.msk [vmem:[#allocation0] sm:$0x1] %vm21, %v20
    %s23 = scalar_lea.vmem %s0, 12
    %v24 = vld [vmem:[%s23] sm:$0x1]
    %25 = vrot.lane.b32.xlu0 %v24, 96
    %v26 = vpop.permute.xlu0 %25
    %vm27 = vcmask 851712
    %28 = vst.msk [vmem:[#allocation0] sm:$0x1] %vm27, %v26
    %s29 = scalar_lea.vmem %s0, 11
    %v30 = vld [vmem:[%s29] sm:$0x1]
    %31 = vrot.lane.b32.xlu0 %v30, 88
    %v32 = vpop.permute.xlu0 %31
    %vm33 = vcmask 786112
    %34 = vst.msk [vmem:[#allocation0] sm:$0x1] %vm33, %v32
    %s35 = scalar_lea.vmem %s0, 10
    %v36 = vld [vmem:[%s35] sm:$0x1]
    %37 = vrot.lane.b32.xlu0 %v36, 80
    %v38 = vpop.permute.xlu0 %37
    %vm39 = vcmask 720512
    %40 = vst.msk [vmem:[#allocation0] sm:$0x1] %vm39, %v38
    %s41 = scalar_lea.vmem %s0, 9
    %v42 = vld [vmem:[%s41] sm:$0x1]
    %43 = vrot.lane.b32.xlu0 %v42, 72
    %v44 = vpop.permute.xlu0 %43
    %vm45 = vcmask 654912
    %46 = vst.msk [vmem:[#allocation0] sm:$0x1] %vm45, %v44
    %s47 = scalar_lea.vmem %s0, 8
    %v48 = vld [vmem:[%s47] sm:$0x1]
    %49 = vrot.lane.b32.xlu0 %v48, 64
    %v50 = vpop.permute.xlu0 %49
    %vm51 = vcmask 589312
    %52 = vst.msk [vmem:[#allocation0] sm:$0x1] %vm51, %v50
    %s53 = scalar_lea.vmem %s0, 7
    %v54 = vld [vmem:[%s53] sm:$0x1]
    %55 = vrot.lane.b32.xlu0 %v54, 56
    %v56 = vpop.permute.xlu0 %55
    %vm57 = vcmask 523712
    %58 = vst.msk [vmem:[#allocation0] sm:$0x1] %vm57, %v56
    %s59 = scalar_lea.vmem %s0, 6
    %v60 = vld [vmem:[%s59] sm:$0x1]
    %61 = vrot.lane.b32.xlu0 %v60, 48
    %v62 = vpop.permute.xlu0 %61
    %vm63 = vcmask 458112
    %64 = vst.msk [vmem:[#allocation0] sm:$0x1] %vm63, %v62
    %s65 = scalar_lea.vmem %s0, 5
    %v66 = vld [vmem:[%s65] sm:$0x1]
    %67 = vrot.lane.b32.xlu0 %v66, 40
    %v68 = vpop.permute.xlu0 %67
    %vm69 = vcmask 392512
    %70 = vst.msk [vmem:[#allocation0] sm:$0x1] %vm69, %v68
    %s71 = scalar_lea.vmem %s0, 4
    %v72 = vld [vmem:[%s71] sm:$0x1]
    %73 = vrot.lane.b32.xlu0 %v72, 32
    %v74 = vpop.permute.xlu0 %73
    %vm75 = vcmask 326912
    %76 = vst.msk [vmem:[#allocation0] sm:$0x1] %vm75, %v74
    %s77 = scalar_lea.vmem %s0, 3
    %v78 = vld [vmem:[%s77] sm:$0x1]
    %79 = vrot.lane.b32.xlu0 %v78, 24
    %v80 = vpop.permute.xlu0 %79
    %vm81 = vcmask 261312
    %82 = vst.msk [vmem:[#allocation0] sm:$0x1] %vm81, %v80
    %s83 = scalar_lea.vmem %s0, 2
    %v84 = vld [vmem:[%s83] sm:$0x1]
    %85 = vrot.lane.b32.xlu0 %v84, 16
    %v86 = vpop.permute.xlu0 %85
    %vm87 = vcmask 195712
    %88 = vst.msk [vmem:[#allocation0] sm:$0x1] %vm87, %v86
    %s89 = scalar_lea.vmem %s0, 1
    %v90 = vld [vmem:[%s89] sm:$0x1]
    %91 = vrot.lane.b32.xlu0 %v90, 8
    %v92 = vpop.permute.xlu0 %91
    %vm93 = vcmask 130112
    %94 = vst.msk [vmem:[#allocation0] sm:$0x1] %vm93, %v92
    %s96 = sshllo.u32 0, 1
    %v98 = vld [vmem:[#allocation0] sm:%s96]
    %s99 = sshllo.u32 0, 1
    %100 = vst [vmem:[%s1] sm:%s99] %v98

// kernel: residual_block.1
$region0: #{residual_block.1}
  #allocation0 [shape = 'u32[]', space=smem, size = 0x4, offset = 0x4, fixed_abs, tag = 'smem constant byte address 0x4 - core index']
  #allocation1 [shape = 'u32[144,128]{1,0:T(1,128)}', space=vmem, size = 0x12000, scoped, tag = 'internal scratch']
  %s0 = inlined_call_operand.vmem [shape: f32[2,16,128], index: 0, kind: input, shape index: {}]
  %s1 = inlined_call_operand.vmem [shape: bf16[3,128,128], index: 1, kind: input, shape index: {}]
  %s2 = inlined_call_operand.vmem [shape: f32[1,128], index: 2, kind: input, shape index: {}]
  %s3 = inlined_call_operand.vmem [shape: f32[1,128], index: 3, kind: input, shape index: {}]
  %s4 = inlined_call_operand.vmem [shape: bf16[3,128,128], index: 4, kind: input, shape index: {}]
  %s5 = inlined_call_operand.vmem [shape: f32[1,128], index: 5, kind: input, shape index: {}]
  %s6 = inlined_call_operand.vmem [shape: f32[1,128], index: 6, kind: input, shape index: {}]
  %s7 = inlined_call_operand.vmem [shape: f32[128,128], index: 7, kind: input, shape index: {}]
  %s8 = inlined_call_operand.vmem [shape: f32[2,16,128], index: 8, kind: output, shape index: {}]
  %s9 = sld [smem:[#allocation0]]
  $region65: #{residual_block.1} parent=0
    _
  %s11 = ssub.s32 1, %s9
  %s12 = scalar_select 0, %s11, %s9
  loop: start=0, step=1, limit=4
  $region2: #{residual_block.1} parent=0 // loop_pre_header
    _
  $region3: #{residual_block.1} parent=0 // loop_header
    %s14 = sphi 0, %s18
    %p15 = scmp.ge.s32.totalorder %s14, 4
    %s24 = sphi 0, %s26
    %s27 = sphi 0, %s24
    %s28 = sphi 0, %s27
    %s44 = sphi 0, %s28
    %s48 = sphi 0, %s48
    %s50 = sphi 0, %s48
    %s51 = sphi 0, %s50
    %s65 = sphi 0, %s51
    %s69 = sphi 0, %s69
    %s71 = sphi 0, %s69
    %s72 = sphi 0, %s71
    %s86 = sphi 0, %s72
    %s90 = sphi 0, %s90
    %s92 = sphi 0, %s90
    %s93 = sphi 0, %s92
    %s107 = sphi 0, %s93
    %s111 = sphi 0, %s111
    %s113 = sphi 0, %s111
    %s114 = sphi 0, %s113
    %s128 = sphi 0, %s114
    %s132 = sphi 0, %s132
    %s134 = sphi 0, %s132
    %s135 = sphi 0, %s134
    %s149 = sphi 0, %s135
    %s153 = sphi 0, %s153
    %s155 = sphi 0, %s153
    %s156 = sphi 0, %s155
    %s170 = sphi 0, %s156
    %s174 = sphi 0, %s174
    %s176 = sphi 0, %s174
    %s177 = sphi 0, %s176
    %s191 = sphi 0, %s177
    %s197 = sphi 0, %s199
    %s200 = sphi 0, %s197
    %s201 = sphi 0, %s200
    %s217 = sphi 0, %s201
  $region4: #{residual_block.1} parent=0 // loop_header_branch
    %17 = sbr.rel (%p15) target = $region8
  $region5: #{residual_block.1} parent=0 // loop_body
    %s19 = ssub.s32 %s14, 1
    %s20 = ssub.s32 %s14, 2
    %s21 = sadd.s32 %s14, 1
    %s22 = ssub.s32 %s14, %s21
    %p23 = scmp.eq.s32.totalorder %s22, 0
    %s25 = sadd.s32 %s24, 1
    %s26 = scalar_select %p23, %s24, %s25
    %p29 = pneg %p23
    %p30 = scmp.eq.s32.totalorder %s14, 1
    %p31 = por %p29, %p30
    %p32 = scmp.ne.s32.totalorder %s24, %s27
    %p33 = scmp.eq.s32.totalorder %s14, 0
    %p34 = por %p32, %p33
    %p35 = scmp.ne.s32.totalorder %s24, %s27
    %p36 = scmp.eq.s32.totalorder %s19, 1
    %p37 = por %p35, %p36
    %p38 = scmp.ne.s32.totalorder %s27, %s28
    %p39 = scmp.eq.s32.totalorder %s19, 0
    %p40 = por %p38, %p39
    %p41 = scmp.ne.s32.totalorder %s27, %s28
    %p42 = scmp.eq.s32.totalorder %s20, 1
    %p43 = por %p41, %p42
    %p45 = scmp.ne.s32.totalorder %s28, %s44
    %p46 = scmp.eq.s32.totalorder %s20, 0
    %p47 = por %p45, %p46
    %s49 = sadd.s32 %s48, 1
    %p52 = scmp.eq.s32.totalorder %s14, 1
    %p53 = scmp.ne.s32.totalorder %s48, %s50
    %p54 = scmp.eq.s32.totalorder %s14, 0
    %p55 = por %p53, %p54
    %p56 = scmp.ne.s32.totalorder %s48, %s50
    %p57 = scmp.eq.s32.totalorder %s19, 1
    %p58 = por %p56, %p57
    %p59 = scmp.ne.s32.totalorder %s50, %s51
    %p60 = scmp.eq.s32.totalorder %s19, 0
    %p61 = por %p59, %p60
    %p62 = scmp.ne.s32.totalorder %s50, %s51
    %p63 = scmp.eq.s32.totalorder %s20, 1
    %p64 = por %p62, %p63
    %p66 = scmp.ne.s32.totalorder %s51, %s65
    %p67 = scmp.eq.s32.totalorder %s20, 0
    %p68 = por %p66, %p67
    %s70 = sadd.s32 %s69, 1
    %p73 = scmp.eq.s32.totalorder %s14, 1
    %p74 = scmp.ne.s32.totalorder %s69, %s71
    %p75 = scmp.eq.s32.totalorder %s14, 0
    %p76 = por %p74, %p75
    %p77 = scmp.ne.s32.totalorder %s69, %s71
    %p78 = scmp.eq.s32.totalorder %s19, 1
    %p79 = por %p77, %p78
    %p80 = scmp.ne.s32.totalorder %s71, %s72
    %p81 = scmp.eq.s32.totalorder %s19, 0
    %p82 = por %p80, %p81
    %p83 = scmp.ne.s32.totalorder %s71, %s72
    %p84 = scmp.eq.s32.totalorder %s20, 1
    %p85 = por %p83, %p84
    %p87 = scmp.ne.s32.totalorder %s72, %s86
    %p88 = scmp.eq.s32.totalorder %s20, 0
    %p89 = por %p87, %p88
    %s91 = sadd.s32 %s90, 1
    %p94 = scmp.eq.s32.totalorder %s14, 1
    %p95 = scmp.ne.s32.totalorder %s90, %s92
    %p96 = scmp.eq.s32.totalorder %s14, 0
    %p97 = por %p95, %p96
    %p98 = scmp.ne.s32.totalorder %s90, %s92
    %p99 = scmp.eq.s32.totalorder %s19, 1
    %p100 = por %p98, %p99
    %p101 = scmp.ne.s32.totalorder %s92, %s93
    %p102 = scmp.eq.s32.totalorder %s19, 0
    %p103 = por %p101, %p102
    %p104 = scmp.ne.s32.totalorder %s92, %s93
    %p105 = scmp.eq.s32.totalorder %s20, 1
    %p106 = por %p104, %p105
    %p108 = scmp.ne.s32.totalorder %s93, %s107
    %p109 = scmp.eq.s32.totalorder %s20, 0
    %p110 = por %p108, %p109
    %s112 = sadd.s32 %s111, 1
    %p115 = scmp.eq.s32.totalorder %s14, 1
    %p116 = scmp.ne.s32.totalorder %s111, %s113
    %p117 = scmp.eq.s32.totalorder %s14, 0
    %p118 = por %p116, %p117
    %p119 = scmp.ne.s32.totalorder %s111, %s113
    %p120 = scmp.eq.s32.totalorder %s19, 1
    %p121 = por %p119, %p120
    %p122 = scmp.ne.s32.totalorder %s113, %s114
    %p123 = scmp.eq.s32.totalorder %s19, 0
    %p124 = por %p122, %p123
    %p125 = scmp.ne.s32.totalorder %s113, %s114
    %p126 = scmp.eq.s32.totalorder %s20, 1
    %p127 = por %p125, %p126
    %p129 = scmp.ne.s32.totalorder %s114, %s128
    %p130 = scmp.eq.s32.totalorder %s20, 0
    %p131 = por %p129, %p130
    %s133 = sadd.s32 %s132, 1
    %p136 = scmp.eq.s32.totalorder %s14, 1
    %p137 = scmp.ne.s32.totalorder %s132, %s134
    %p138 = scmp.eq.s32.totalorder %s14, 0
    %p139 = por %p137, %p138
    %p140 = scmp.ne.s32.totalorder %s132, %s134
    %p141 = scmp.eq.s32.totalorder %s19, 1
    %p142 = por %p140, %p141
    %p143 = scmp.ne.s32.totalorder %s134, %s135
    %p144 = scmp.eq.s32.totalorder %s19, 0
    %p145 = por %p143, %p144
    %p146 = scmp.ne.s32.totalorder %s134, %s135
    %p147 = scmp.eq.s32.totalorder %s20, 1
    %p148 = por %p146, %p147
    %p150 = scmp.ne.s32.totalorder %s135, %s149
    %p151 = scmp.eq.s32.totalorder %s20, 0
    %p152 = por %p150, %p151
    %s154 = sadd.s32 %s153, 1
    %p157 = scmp.eq.s32.totalorder %s14, 1
    %p158 = scmp.ne.s32.totalorder %s153, %s155
    %p159 = scmp.eq.s32.totalorder %s14, 0
    %p160 = por %p158, %p159
    %p161 = scmp.ne.s32.totalorder %s153, %s155
    %p162 = scmp.eq.s32.totalorder %s19, 1
    %p163 = por %p161, %p162
    %p164 = scmp.ne.s32.totalorder %s155, %s156
    %p165 = scmp.eq.s32.totalorder %s19, 0
    %p166 = por %p164, %p165
    %p167 = scmp.ne.s32.totalorder %s155, %s156
    %p168 = scmp.eq.s32.totalorder %s20, 1
    %p169 = por %p167, %p168
    %p171 = scmp.ne.s32.totalorder %s156, %s170
    %p172 = scmp.eq.s32.totalorder %s20, 0
    %p173 = por %p171, %p172
    %s175 = sadd.s32 %s174, 1
    %p178 = scmp.eq.s32.totalorder %s14, 1
    %p179 = scmp.ne.s32.totalorder %s174, %s176
    %p180 = scmp.eq.s32.totalorder %s14, 0
    %p181 = por %p179, %p180
    %p182 = scmp.ne.s32.totalorder %s174, %s176
    %p183 = scmp.eq.s32.totalorder %s19, 1
    %p184 = por %p182, %p183
    %p185 = scmp.ne.s32.totalorder %s176, %s177
    %p186 = scmp.eq.s32.totalorder %s19, 0
    %p187 = por %p185, %p186
    %p188 = scmp.ne.s32.totalorder %s176, %s177
    %p189 = scmp.eq.s32.totalorder %s20, 1
    %p190 = por %p188, %p189
    %p192 = scmp.ne.s32.totalorder %s177, %s191
    %p193 = scmp.eq.s32.totalorder %s20, 0
    %p194 = por %p192, %p193
    %s195 = ssub.s32 %s14, %s21
    %p196 = scmp.eq.s32.totalorder %s195, 0
    %s198 = sadd.s32 %s197, 1
    %s199 = scalar_select %p196, %s197, %s198
    %p202 = pneg %p196
    %p203 = scmp.eq.s32.totalorder %s14, 1
    %p204 = por %p202, %p203
    %p205 = scmp.ne.s32.totalorder %s197, %s200
    %p206 = scmp.eq.s32.totalorder %s14, 0
    %p207 = por %p205, %p206
    %p208 = scmp.ne.s32.totalorder %s197, %s200
    %p209 = scmp.eq.s32.totalorder %s19, 1
    %p210 = por %p208, %p209
    %p211 = scmp.ne.s32.totalorder %s200, %s201
    %p212 = scmp.eq.s32.totalorder %s19, 0
    %p213 = por %p211, %p212
    %p214 = scmp.ne.s32.totalorder %s200, %s201
    %p215 = scmp.eq.s32.totalorder %s20, 1
    %p216 = por %p214, %p215
    %p218 = scmp.ne.s32.totalorder %s201, %s217
    %p219 = scmp.eq.s32.totalorder %s20, 0
    %p220 = por %p218, %p219
    %p221 = scmp.le.s32.totalorder 1, %s14
    %p222 = scmp.lt.s32.totalorder %s14, 3
    %p223 = pnand %p221, %p222
    %p224 = pneg %p223
    // Predicated region
    $region9: #{residual_block.1} parent=5 // pred_check
      _
    $region10: #{residual_block.1} parent=5 // pred_check_branch
      %226 = sbr.rel (%p223) target = $region12
    $region11: #{residual_block.1} parent=5 // pred_region
      %s227 = ssub.s32 %s14, 1
      // Predicated region
      $region13: #{residual_block.1} parent=11 // pred_check
        %p228 = pneg %p61
      $region14: #{residual_block.1} parent=11 // pred_check_branch
        %230 = sbr.rel (%p228) target = $region16
      $region15: #{residual_block.1} parent=11 // pred_region
        _
      $region16: #{residual_block.1} parent=11 // pred_fallthru
        _
      // Predicated region
      $region17: #{residual_block.1} parent=11 // pred_check
        %p231 = pneg %p82
      $region18: #{residual_block.1} parent=11 // pred_check_branch
        %233 = sbr.rel (%p231) target = $region20
      $region19: #{residual_block.1} parent=11 // pred_region
        _
      $region20: #{residual_block.1} parent=11 // pred_fallthru
        _
      // Predicated region
      $region21: #{residual_block.1} parent=11 // pred_check
        %p234 = pneg %p103
      $region22: #{residual_block.1} parent=11 // pred_check_branch
        %236 = sbr.rel (%p234) target = $region24
      $region23: #{residual_block.1} parent=11 // pred_region
        _
      $region24: #{residual_block.1} parent=11 // pred_fallthru
        _
      // Predicated region
      $region25: #{residual_block.1} parent=11 // pred_check
        %p237 = pneg %p124
      $region26: #{residual_block.1} parent=11 // pred_check_branch
        %239 = sbr.rel (%p237) target = $region28
      $region27: #{residual_block.1} parent=11 // pred_region
        _
      $region28: #{residual_block.1} parent=11 // pred_fallthru
        _
      // Predicated region
      $region29: #{residual_block.1} parent=11 // pred_check
        %p240 = pneg %p145
      $region30: #{residual_block.1} parent=11 // pred_check_branch
        %242 = sbr.rel (%p240) target = $region32
      $region31: #{residual_block.1} parent=11 // pred_region
        _
      $region32: #{residual_block.1} parent=11 // pred_fallthru
        _
      // Predicated region
      $region33: #{residual_block.1} parent=11 // pred_check
        %p243 = pneg %p166
      $region34: #{residual_block.1} parent=11 // pred_check_branch
        %245 = sbr.rel (%p243) target = $region36
      $region35: #{residual_block.1} parent=11 // pred_region
        _
      $region36: #{residual_block.1} parent=11 // pred_fallthru
        _
      // Predicated region
      $region37: #{residual_block.1} parent=11 // pred_check
        %p246 = pneg %p187
      $region38: #{residual_block.1} parent=11 // pred_check_branch
        %248 = sbr.rel (%p246) target = $region40
      $region39: #{residual_block.1} parent=11 // pred_region
        _
      $region40: #{residual_block.1} parent=11 // pred_fallthru
        _
    $region12: #{residual_block.1} parent=5 // pred_fallthru
      _
    %p249 = scmp.lt.s32.totalorder %s14, 2
    // Predicated region
    $region41: #{residual_block.1} parent=5 // pred_check
      %p250 = pneg %p249
    $region42: #{residual_block.1} parent=5 // pred_check_branch
      %252 = sbr.rel (%p250) target = $region44
    $region43: #{residual_block.1} parent=5 // pred_region
      // Predicated region
      $region45: #{residual_block.1} parent=43 // pred_check
        %p253 = pneg %p34
      $region46: #{residual_block.1} parent=43 // pred_check_branch
        %255 = sbr.rel (%p253) target = $region48
      $region47: #{residual_block.1} parent=43 // pred_region
        %p256 = scmp.lt.s32.totalorder %s14, 1
        %s257 = scalar_select %p256, %s14, 1
        %s258 = smul.addr %s257, 2
        %s259 = smul.addr %s258, 8
        %s260 = scalar_lea.vmem %s0, %s259
      $region48: #{residual_block.1} parent=43 // pred_fallthru
        _
    $region44: #{residual_block.1} parent=5 // pred_fallthru
      _
    %p261 = scmp.le.s32.totalorder 1, %s14
    %p262 = scmp.lt.s32.totalorder %s14, 3
    %p263 = pnand %p261, %p262
    %p264 = pneg %p263
    // Predicated region
    $region49: #{residual_block.1} parent=5 // pred_check
      _
    $region50: #{residual_block.1} parent=5 // pred_check_branch
      %266 = sbr.rel (%p263) target = $region52
    $region51: #{residual_block.1} parent=5 // pred_region
      %s267 = ssub.s32 %s14, 1
      %p268 = scmp.lt.s32.totalorder %s19, 1
      %s269 = scalar_select %p268, %s19, 1
      %s270 = smul.addr %s269, 2
      %s271 = smul.addr %s270, 8
      %s272 = scalar_lea.vmem %s0, %s271
      %p273 = pneg %p40
      %p274 = pneg %p37
      %p275 = pneg %p61
      %p276 = pneg %p58
      %p277 = pneg %p82
      %p278 = pneg %p79
      %p279 = pneg %p103
      %p280 = pneg %p100
      %p281 = pneg %p124
      %p282 = pneg %p121
      %p283 = pneg %p145
      %p284 = pneg %p142
      %p285 = pneg %p166
      %p286 = pneg %p163
      %p287 = pneg %p187
      %p288 = pneg %p184
      %p289 = pneg %p213
      %p290 = pneg %p210
      %p291 = scmp.lt.s32.totalorder %s19, 1
      %s292 = scalar_select %p291, %s19, 1
      %s293 = smul.addr %s292, 2
      %s294 = smul.addr %s293, 8
      %s295 = scalar_lea.vmem %s8, %s294
      %p296 = scmp.lt.s32.totalorder %s19, 1
      %s297 = scalar_select %p296, %s19, 1
      %s298 = smul.addr %s297, 2
      %s299 = smul.addr %s298, 8
      %s300 = scalar_lea.vmem %s0, %s299
      %p301 = scmp.lt.s32.totalorder %s19, 1
      %s302 = scalar_select %p301, %s19, 1
      %s303 = smul.addr %s302, 2
      %s304 = smul.addr %s303, 8
      %s305 = scalar_lea.vmem %s8, %s304
      %v307 = vld [vmem:[%s300] sm:$0xff]
      %v308 = vld [vmem:[%s300 + $0x8] sm:$0xff]
      %v309 = vld [vmem:[%s7] sm:$0xff]
      %v310 = vld [vmem:[%s7 + $0x8] sm:$0xff]
      %v311 = vld [vmem:[%s7 + $0x10] sm:$0xff]
      %v312 = vld [vmem:[%s7 + $0x18] sm:$0xff]
      %v313 = vld [vmem:[%s7 + $0x20] sm:$0xff]
      %v314 = vld [vmem:[%s7 + $0x28] sm:$0xff]
      %v315 = vld [vmem:[%s7 + $0x30] sm:$0xff]
      %v316 = vld [vmem:[%s7 + $0x38] sm:$0xff]
      %v317 = vld [vmem:[%s7 + $0x40] sm:$0xff]
      %v318 = vld [vmem:[%s7 + $0x48] sm:$0xff]
      %v319 = vld [vmem:[%s7 + $0x50] sm:$0xff]
      %v320 = vld [vmem:[%s7 + $0x58] sm:$0xff]
      %v321 = vld [vmem:[%s7 + $0x60] sm:$0xff]
      %v322 = vld [vmem:[%s7 + $0x68] sm:$0xff]
      %v323 = vld [vmem:[%s7 + $0x70] sm:$0xff]
      %v324 = vld [vmem:[%s7 + $0x78] sm:$0xff]
      %v325 = vpack.c.bf16 %v308, %v307
      %v327 = vshrl.u32 %v325, 16
      %v329 = vrot.slane %v327, 7
      %v330 = vshll.u32 %v325, 16
      %v332 = vor.u32 %v329, %v330
      %vm334 = vcmask 1040384
      %vm335 = vsmask.f32 256
      %vm336 = vmand %vm334, %vm335
      %v337 = vsel %vm336, 0, %v332
      %v338 = vld [vmem:[%s1] sm:$0xf]
      %v339 = vld [vmem:[%s1 + $0x4] sm:$0xf]
      %v340 = vld [vmem:[%s1 + $0x8] sm:$0xf]
      %v341 = vld [vmem:[%s1 + $0xc] sm:$0xf]
      %v342 = vld [vmem:[%s1 + $0x10] sm:$0xf]
      %v343 = vld [vmem:[%s1 + $0x14] sm:$0xf]
      %v344 = vld [vmem:[%s1 + $0x18] sm:$0xf]
      %v345 = vld [vmem:[%s1 + $0x1c] sm:$0xf]
      %v346 = vld [vmem:[%s1 + $0x20] sm:$0xf]
      %v347 = vld [vmem:[%s1 + $0x24] sm:$0xf]
      %v348 = vld [vmem:[%s1 + $0x28] sm:$0xf]
      %v349 = vld [vmem:[%s1 + $0x2c] sm:$0xf]
      %v350 = vld [vmem:[%s1 + $0x30] sm:$0xf]
      %v351 = vld [vmem:[%s1 + $0x34] sm:$0xf]
      %v352 = vld [vmem:[%s1 + $0x38] sm:$0xf]
      %v353 = vld [vmem:[%s1 + $0x3c] sm:$0xf]
      %s354 = scalar_lea.vmem %s1, 64
      %v355 = vld [vmem:[%s354] sm:$0xf]
      %v356 = vld [vmem:[%s354 + $0x4] sm:$0xf]
      %v357 = vld [vmem:[%s354 + $0x8] sm:$0xf]
      %v358 = vld [vmem:[%s354 + $0xc] sm:$0xf]
      %v359 = vld [vmem:[%s354 + $0x10] sm:$0xf]
      %v360 = vld [vmem:[%s354 + $0x14] sm:$0xf]
      %v361 = vld [vmem:[%s354 + $0x18] sm:$0xf]
      %v362 = vld [vmem:[%s354 + $0x1c] sm:$0xf]
      %v363 = vld [vmem:[%s354 + $0x20] sm:$0xf]
      %v364 = vld [vmem:[%s354 + $0x24] sm:$0xf]
      %v365 = vld [vmem:[%s354 + $0x28] sm:$0xf]
      %v366 = vld [vmem:[%s354 + $0x2c] sm:$0xf]
      %v367 = vld [vmem:[%s354 + $0x30] sm:$0xf]
      %v368 = vld [vmem:[%s354 + $0x34] sm:$0xf]
      %v369 = vld [vmem:[%s354 + $0x38] sm:$0xf]
      %v370 = vld [vmem:[%s354 + $0x3c] sm:$0xf]
      %v387 = vunpack.c.l.b16 %v355
      %v388 = vunpack.c.l.b16 %v356
      %v389 = vunpack.c.l.b16 %v357
      %v390 = vunpack.c.l.b16 %v358
      %v391 = vunpack.c.l.b16 %v359
      %v392 = vunpack.c.l.b16 %v360
      %v393 = vunpack.c.l.b16 %v361
      %v394 = vunpack.c.l.b16 %v362
      %v395 = vunpack.c.l.b16 %v363
      %v396 = vunpack.c.l.b16 %v364
      %v397 = vunpack.c.l.b16 %v365
      %v398 = vunpack.c.l.b16 %v366
      %v399 = vunpack.c.l.b16 %v367
      %v400 = vunpack.c.l.b16 %v368
      %v401 = vunpack.c.l.b16 %v369
      %v402 = vunpack.c.l.b16 %v370
      %v403 = vpack.c.b16 %v388, %v387
      %v404 = vpack.c.b16 %v390, %v389
      %v405 = vpack.c.b16 %v392, %v391
      %v406 = vpack.c.b16 %v394, %v393
      %v407 = vpack.c.b16 %v396, %v395
      %v408 = vpack.c.b16 %v398, %v397
      %v409 = vpack.c.b16 %v400, %v399
      %v410 = vpack.c.b16 %v402, %v401
      %419 = vmatprep.subr.bf16.mxu0 0
      %420 = vmatpush1.bf16.msra.mxu0 %v403
      %421 = vmatprep.subr.bf16.mxu0 0
      %422 = vmatpush1.bf16.msra.mxu0 %v404
      %423 = vmatprep.subr.bf16.mxu0 0
      %424 = vmatpush1.bf16.msra.mxu0 %v405
      %425 = vmatprep.subr.bf16.mxu0 0
      %426 = vmatpush1.bf16.msra.mxu0 %v406
      %427 = vmatprep.subr.bf16.mxu0 0
      %428 = vmatpush1.bf16.msra.mxu0 %v407
      %429 = vmatprep.subr.bf16.mxu0 0
      %430 = vmatpush1.bf16.msra.mxu0 %v408
      %431 = vmatprep.subr.bf16.mxu0 0
      %432 = vmatpush1.bf16.msra.mxu0 %v409
      %433 = vmatprep.subr.bf16.mxu0 0
      %434 = vmatpush1.bf16.msra.mxu0 %v410
      %435 = vmatprep.subr.bf16.mxu0 0
      %436 = vmatpush1.bf16.msra.mxu0 0
      %437 = vmatprep.subr.bf16.mxu0 0
      %438 = vmatpush1.bf16.msra.mxu0 0
      %439 = vmatprep.subr.bf16.mxu0 0
      %440 = vmatpush1.bf16.msra.mxu0 0
      %441 = vmatprep.subr.bf16.mxu0 0
      %442 = vmatpush1.bf16.msra.mxu0 0
      %443 = vmatprep.subr.bf16.mxu0 0
      %444 = vmatpush1.bf16.msra.mxu0 0
      %445 = vmatprep.subr.bf16.mxu0 0
      %446 = vmatpush1.bf16.msra.mxu0 0
      %447 = vmatprep.subr.bf16.mxu0 0
      %448 = vmatpush1.bf16.msra.mxu0 0
      %449 = vmatprep.subr.bf16.mxu0 0
      %450 = vmatpush1.bf16.msra.mxu0 0
      %451 = vmatprep.mubr.bf16.mxu0 0
      %452 = vmatmul.mubr.bf16.gmra.mrb[0].mxu0 %v325
      %v453 = vpop.f32.mrb[0].mxu0
      %v454 = vadd.f32 0.0, %v453
      %v455 = vpop.f32.mrb[0].mxu0
      %v456 = vpop.f32.mrb[0].mxu0
      %v457 = vadd.f32 0.0, %v456
      %v458 = vpop.f32.mrb[0].mxu0
      %459 = vdwg.mxu0
      %v476 = vunpack.c.l.b16 %v338
      %v477 = vunpack.c.l.b16 %v339
      %v478 = vunpack.c.l.b16 %v340
      %v479 = vunpack.c.l.b16 %v341
      %v480 = vunpack.c.l.b16 %v342
      %v481 = vunpack.c.l.b16 %v343
      %v482 = vunpack.c.l.b16 %v344
      %v483 = vunpack.c.l.b16 %v345
      %v484 = vunpack.c.l.b16 %v346
      %v485 = vunpack.c.l.b16 %v347
      %v486 = vunpack.c.l.b16 %v348
      %v487 = vunpack.c.l.b16 %v349
      %v488 = vunpack.c.l.b16 %v350
      %v489 = vunpack.c.l.b16 %v351
      %v490 = vunpack.c.l.b16 %v352
      %v491 = vunpack.c.l.b16 %v353
      %v492 = vpack.c.b16 %v477, %v476
      %v493 = vpack.c.b16 %v479, %v478
      %v494 = vpack.c.b16 %v481, %v480
      %v495 = vpack.c.b16 %v483, %v482
      %v496 = vpack.c.b16 %v485, %v484
      %v497 = vpack.c.b16 %v487, %v486
      %v498 = vpack.c.b16 %v489, %v488
      %v499 = vpack.c.b16 %v491, %v490
      %508 = vmatprep.subr.bf16.mxu0 0
      %509 = vmatpush1.bf16.msra.mxu0 %v492
      %510 = vmatprep.subr.bf16.mxu0 0
      %511 = vmatpush1.bf16.msra.mxu0 %v493
      %512 = vmatprep.subr.bf16.mxu0 0
      %513 = vmatpush1.bf16.msra.mxu0 %v494
      %514 = vmatprep.subr.bf16.mxu0 0
      %515 = vmatpush1.bf16.msra.mxu0 %v495
      %516 = vmatprep.subr.bf16.mxu0 0
      %517 = vmatpush1.bf16.msra.mxu0 %v496
      %518 = vmatprep.subr.bf16.mxu0 0
      %519 = vmatpush1.bf16.msra.mxu0 %v497
      %520 = vmatprep.subr.bf16.mxu0 0
      %521 = vmatpush1.bf16.msra.mxu0 %v498
      %522 = vmatprep.subr.bf16.mxu0 0
      %523 = vmatpush1.bf16.msra.mxu0 %v499
      %524 = vmatprep.subr.bf16.mxu0 0
      %525 = vmatpush1.bf16.msra.mxu0 0
      %526 = vmatprep.subr.bf16.mxu0 0
      %527 = vmatpush1.bf16.msra.mxu0 0
      %528 = vmatprep.subr.bf16.mxu0 0
      %529 = vmatpush1.bf16.msra.mxu0 0
      %530 = vmatprep.subr.bf16.mxu0 0
      %531 = vmatpush1.bf16.msra.mxu0 0
      %532 = vmatprep.subr.bf16.mxu0 0
      %533 = vmatpush1.bf16.msra.mxu0 0
      %534 = vmatprep.subr.bf16.mxu0 0
      %535 = vmatpush1.bf16.msra.mxu0 0
      %536 = vmatprep.subr.bf16.mxu0 0
      %537 = vmatpush1.bf16.msra.mxu0 0
      %538 = vmatprep.subr.bf16.mxu0 0
      %539 = vmatpush1.bf16.msra.mxu0 0
      %540 = vmatprep.mubr.bf16.mxu0 0
      %541 = vmatmul.mubr.bf16.gmra.mrb[0].mxu0 %v337
      %v542 = vpop.f32.mrb[0].mxu0
      %v543 = vadd.f32 %v454, %v542
      %v544 = vpop.f32.mrb[0].mxu0
      %v545 = vpop.f32.mrb[0].mxu0
      %v546 = vadd.f32 %v457, %v545
      %v547 = vpop.f32.mrb[0].mxu0
      %548 = vdwg.mxu0
      %v549 = vrot.slane %v330, 1
      %v550 = vor.u32 %v327, %v549
      %vm552 = vcmask 1047552
      %vm553 = vsmask.f32 7424
      %vm554 = vmand %vm552, %vm553
      %v555 = vsel %vm554, %v550, 0
      %s556 = scalar_lea.vmem %s1, 128
      %v557 = vld [vmem:[%s556] sm:$0xf]
      %v558 = vld [vmem:[%s556 + $0x4] sm:$0xf]
      %v559 = vld [vmem:[%s556 + $0x8] sm:$0xf]
      %v560 = vld [vmem:[%s556 + $0xc] sm:$0xf]
      %v561 = vld [vmem:[%s556 + $0x10] sm:$0xf]
      %v562 = vld [vmem:[%s556 + $0x14] sm:$0xf]
      %v563 = vld [vmem:[%s556 + $0x18] sm:$0xf]
      %v564 = vld [vmem:[%s556 + $0x1c] sm:$0xf]
      %v565 = vld [vmem:[%s556 + $0x20] sm:$0xf]
      %v566 = vld [vmem:[%s556 + $0x24] sm:$0xf]
      %v567 = vld [vmem:[%s556 + $0x28] sm:$0xf]
      %v568 = vld [vmem:[%s556 + $0x2c] sm:$0xf]
      %v569 = vld [vmem:[%s556 + $0x30] sm:$0xf]
      %v570 = vld [vmem:[%s556 + $0x34] sm:$0xf]
      %v571 = vld [vmem:[%s556 + $0x38] sm:$0xf]
      %v572 = vld [vmem:[%s556 + $0x3c] sm:$0xf]
      %v589 = vunpack.c.l.b16 %v557
      %v590 = vunpack.c.l.b16 %v558
      %v591 = vunpack.c.l.b16 %v559
      %v592 = vunpack.c.l.b16 %v560
      %v593 = vunpack.c.l.b16 %v561
      %v594 = vunpack.c.l.b16 %v562
      %v595 = vunpack.c.l.b16 %v563
      %v596 = vunpack.c.l.b16 %v564
      %v597 = vunpack.c.l.b16 %v565
      %v598 = vunpack.c.l.b16 %v566
      %v599 = vunpack.c.l.b16 %v567
      %v600 = vunpack.c.l.b16 %v568
      %v601 = vunpack.c.l.b16 %v569
      %v602 = vunpack.c.l.b16 %v570
      %v603 = vunpack.c.l.b16 %v571
      %v604 = vunpack.c.l.b16 %v572
      %v605 = vpack.c.b16 %v590, %v589
      %v606 = vpack.c.b16 %v592, %v591
      %v607 = vpack.c.b16 %v594, %v593
      %v608 = vpack.c.b16 %v596, %v595
      %v609 = vpack.c.b16 %v598, %v597
      %v610 = vpack.c.b16 %v600, %v599
      %v611 = vpack.c.b16 %v602, %v601
      %v612 = vpack.c.b16 %v604, %v603
      %621 = vmatprep.subr.bf16.mxu0 0
      %622 = vmatpush1.bf16.msra.mxu0 %v605
      %623 = vmatprep.subr.bf16.mxu0 0
      %624 = vmatpush1.bf16.msra.mxu0 %v606
      %625 = vmatprep.subr.bf16.mxu0 0
      %626 = vmatpush1.bf16.msra.mxu0 %v607
      %627 = vmatprep.subr.bf16.mxu0 0
      %628 = vmatpush1.bf16.msra.mxu0 %v608
      %629 = vmatprep.subr.bf16.mxu0 0
      %630 = vmatpush1.bf16.msra.mxu0 %v609
      %631 = vmatprep.subr.bf16.mxu0 0
      %632 = vmatpush1.bf16.msra.mxu0 %v610
      %633 = vmatprep.subr.bf16.mxu0 0
      %634 = vmatpush1.bf16.msra.mxu0 %v611
      %635 = vmatprep.subr.bf16.mxu0 0
      %636 = vmatpush1.bf16.msra.mxu0 %v612
      %637 = vmatprep.subr.bf16.mxu0 0
      %638 = vmatpush1.bf16.msra.mxu0 0
      %639 = vmatprep.subr.bf16.mxu0 0
      %640 = vmatpush1.bf16.msra.mxu0 0
      %641 = vmatprep.subr.bf16.mxu0 0
      %642 = vmatpush1.bf16.msra.mxu0 0
      %643 = vmatprep.subr.bf16.mxu0 0
      %644 = vmatpush1.bf16.msra.mxu0 0
      %645 = vmatprep.subr.bf16.mxu0 0
      %646 = vmatpush1.bf16.msra.mxu0 0
      %647 = vmatprep.subr.bf16.mxu0 0
      %648 = vmatpush1.bf16.msra.mxu0 0
      %649 = vmatprep.subr.bf16.mxu0 0
      %650 = vmatpush1.bf16.msra.mxu0 0
      %651 = vmatprep.subr.bf16.mxu0 0
      %652 = vmatpush1.bf16.msra.mxu0 0
      %653 = vmatprep.mubr.bf16.mxu0 0
      %654 = vmatmul.mubr.bf16.gmra.mrb[0].mxu0 %v555
      %v655 = vpop.f32.mrb[0].mxu0
      %v656 = vadd.f32 0.0, %v655
      %v657 = vpop.f32.mrb[0].mxu0
      %v658 = vpop.f32.mrb[0].mxu0
      %v659 = vadd.f32 0.0, %v658
      %v660 = vpop.f32.mrb[0].mxu0
      %661 = vdwg.mxu0
      %v662 = vadd.f32 %v543, %v656
      %v663 = vadd.f32 %v546, %v659
      %v664 = vld [vmem:[%s2] sm:$0x1]
      %v665 = vld [vmem:[%s3] sm:$0x1]
      %666 = vmatprep.subr.mxu0 0.0
      %667 = vmatpush1.msra.mxu0 %v309
      %668 = vmatprep.subr.mxu0 0.0
      %669 = vmatpush1.msra.mxu0 %v310
      %670 = vmatprep.subr.mxu0 0.0
      %671 = vmatpush1.msra.mxu0 %v311
      %672 = vmatprep.subr.mxu0 0.0
      %673 = vmatpush1.msra.mxu0 %v312
      %674 = vmatprep.subr.mxu0 0.0
      %675 = vmatpush1.msra.mxu0 %v313
      %676 = vmatprep.subr.mxu0 0.0
      %677 = vmatpush1.msra.mxu0 %v314
      %678 = vmatprep.subr.mxu0 0.0
      %679 = vmatpush1.msra.mxu0 %v315
      %680 = vmatprep.subr.mxu0 0.0
      %681 = vmatpush1.msra.mxu0 %v316
      %682 = vmatprep.subr.mxu0 0.0
      %683 = vmatpush1.msra.mxu0 %v317
      %684 = vmatprep.subr.mxu0 0.0
      %685 = vmatpush1.msra.mxu0 %v318
      %686 = vmatprep.subr.mxu0 0.0
      %687 = vmatpush1.msra.mxu0 %v319
      %688 = vmatprep.subr.mxu0 0.0
      %689 = vmatpush1.msra.mxu0 %v320
      %690 = vmatprep.subr.mxu0 0.0
      %691 = vmatpush1.msra.mxu0 %v321
      %692 = vmatprep.subr.mxu0 0.0
      %693 = vmatpush1.msra.mxu0 %v322
      %694 = vmatprep.subr.mxu0 0.0
      %695 = vmatpush1.msra.mxu0 %v323
      %696 = vmatprep.subr.mxu0 0.0
      %697 = vmatpush1.msra.mxu0 %v324
      %698 = vmatprep.subr.mxu0 0.0
      %699 = vmatpush1.msra.mxu0 0.0
      %700 = vmatprep.subr.mxu0 0.0
      %701 = vmatpush1.msra.mxu0 0.0
      %702 = vmatprep.subr.mxu0 0.0
      %703 = vmatpush1.msra.mxu0 0.0
      %704 = vmatprep.subr.mxu0 0.0
      %705 = vmatpush1.msra.mxu0 0.0
      %706 = vmatprep.subr.mxu0 0.0
      %707 = vmatpush1.msra.mxu0 0.0
      %708 = vmatprep.subr.mxu0 0.0
      %709 = vmatpush1.msra.mxu0 0.0
      %710 = vmatprep.subr.mxu0 0.0
      %711 = vmatpush1.msra.mxu0 0.0
      %712 = vmatprep.subr.mxu0 0.0
      %713 = vmatpush1.msra.mxu0 0.0
      %714 = vmatprep.subr.mxu0 0.0
      %715 = vmatpush1.msra.mxu0 0.0
      %716 = vmatprep.subr.mxu0 0.0
      %717 = vmatpush1.msra.mxu0 0.0
      %718 = vmatprep.subr.mxu0 0.0
      %719 = vmatpush1.msra.mxu0 0.0
      %720 = vmatprep.subr.mxu0 0.0
      %721 = vmatpush1.msra.mxu0 0.0
      %722 = vmatprep.subr.mxu0 0.0
      %723 = vmatpush1.msra.mxu0 0.0
      %724 = vmatprep.subr.mxu0 0.0
      %725 = vmatpush1.msra.mxu0 0.0
      %726 = vmatprep.subr.mxu0 0.0
      %727 = vmatpush1.msra.mxu0 0.0
      %728 = vmatprep.subr.mxu0 0.0
      %729 = vmatpush1.msra.mxu0 0.0
      %730 = vmatprep.mubr.f32.mxu0 0.0
      %731 = vmatmul.mubr.f32.gmra.mrb[0].mxu0 %v662
      %v732 = vpop.f32.mrb[0].mxu0
      %v733 = vadd.f32 0.0, %v732
      %v734 = vpop.f32.mrb[0].mxu0
      %735 = vmatprep.mubr.f32.mxu0 0.0
      %736 = vmatmul.mubr.f32.gmra.mrb[0].mxu0 %v663
      %v737 = vpop.f32.mrb[0].mxu0
      %v738 = vadd.f32 0.0, %v737
      %v739 = vpop.f32.mrb[0].mxu0
      %740 = vdwg.mxu0
      %v741 = vadd.f32 %v733, %v738
      %v742 = vrot.slane %v741, 4
      %v743 = vadd.f32 %v741, %v742
      %v744 = vrot.slane %v743, 2
      %v745 = vadd.f32 %v743, %v744
      %v746 = vrot.slane %v745, 1
      %v747 = vadd.f32 %v745, %v746
      %v748 = vrcp.pop 16.0
      %v749 = vmul.f32 %v747, %v748
      %v750 = vsub.f32 %v662, %v749
      %v751 = vsub.f32 %v663, %v749
      %v752 = vmul.f32 %v750, %v750
      %v753 = vmul.f32 %v751, %v751
      %754 = vmatprep.subr.mxu0 0.0
      %755 = vmatpush1.msra.mxu0 %v309
      %756 = vmatprep.subr.mxu0 0.0
      %757 = vmatpush1.msra.mxu0 %v310
      %758 = vmatprep.subr.mxu0 0.0
      %759 = vmatpush1.msra.mxu0 %v311
      %760 = vmatprep.subr.mxu0 0.0
      %761 = vmatpush1.msra.mxu0 %v312
      %762 = vmatprep.subr.mxu0 0.0
      %763 = vmatpush1.msra.mxu0 %v313
      %764 = vmatprep.subr.mxu0 0.0
      %765 = vmatpush1.msra.mxu0 %v314
      %766 = vmatprep.subr.mxu0 0.0
      %767 = vmatpush1.msra.mxu0 %v315
      %768 = vmatprep.subr.mxu0 0.0
      %769 = vmatpush1.msra.mxu0 %v316
      %770 = vmatprep.subr.mxu0 0.0
      %771 = vmatpush1.msra.mxu0 %v317
      %772 = vmatprep.subr.mxu0 0.0
      %773 = vmatpush1.msra.mxu0 %v318
      %774 = vmatprep.subr.mxu0 0.0
      %775 = vmatpush1.msra.mxu0 %v319
      %776 = vmatprep.subr.mxu0 0.0
      %777 = vmatpush1.msra.mxu0 %v320
      %778 = vmatprep.subr.mxu0 0.0
      %779 = vmatpush1.msra.mxu0 %v321
      %780 = vmatprep.subr.mxu0 0.0
      %781 = vmatpush1.msra.mxu0 %v322
      %782 = vmatprep.subr.mxu0 0.0
      %783 = vmatpush1.msra.mxu0 %v323
      %784 = vmatprep.subr.mxu0 0.0
      %785 = vmatpush1.msra.mxu0 %v324
      %786 = vmatprep.subr.mxu0 0.0
      %787 = vmatpush1.msra.mxu0 0.0
      %788 = vmatprep.subr.mxu0 0.0
      %789 = vmatpush1.msra.mxu0 0.0
      %790 = vmatprep.subr.mxu0 0.0
      %791 = vmatpush1.msra.mxu0 0.0
      %792 = vmatprep.subr.mxu0 0.0
      %793 = vmatpush1.msra.mxu0 0.0
      %794 = vmatprep.subr.mxu0 0.0
      %795 = vmatpush1.msra.mxu0 0.0
      %796 = vmatprep.subr.mxu0 0.0
      %797 = vmatpush1.msra.mxu0 0.0
      %798 = vmatprep.subr.mxu0 0.0
      %799 = vmatpush1.msra.mxu0 0.0
      %800 = vmatprep.subr.mxu0 0.0
      %801 = vmatpush1.msra.mxu0 0.0
      %802 = vmatprep.subr.mxu0 0.0
      %803 = vmatpush1.msra.mxu0 0.0
      %804 = vmatprep.subr.mxu0 0.0
      %805 = vmatpush1.msra.mxu0 0.0
      %806 = vmatprep.subr.mxu0 0.0
      %807 = vmatpush1.msra.mxu0 0.0
      %808 = vmatprep.subr.mxu0 0.0
      %809 = vmatpush1.msra.mxu0 0.0
      %810 = vmatprep.subr.mxu0 0.0
      %811 = vmatpush1.msra.mxu0 0.0
      %812 = vmatprep.subr.mxu0 0.0
      %813 = vmatpush1.msra.mxu0 0.0
      %814 = vmatprep.subr.mxu0 0.0
      %815 = vmatpush1.msra.mxu0 0.0
      %816 = vmatprep.subr.mxu0 0.0
      %817 = vmatpush1.msra.mxu0 0.0
      %818 = vmatprep.mubr.f32.mxu0 0.0
      %819 = vmatmul.mubr.f32.gmra.mrb[0].mxu0 %v752
      %v820 = vpop.f32.mrb[0].mxu0
      %v821 = vadd.f32 0.0, %v820
      %v822 = vpop.f32.mrb[0].mxu0
      %823 = vmatprep.mubr.f32.mxu0 0.0
      %824 = vmatmul.mubr.f32.gmra.mrb[0].mxu0 %v753
      %v825 = vpop.f32.mrb[0].mxu0
      %v826 = vadd.f32 0.0, %v825
      %v827 = vpop.f32.mrb[0].mxu0
      %828 = vdwg.mxu0
      %v829 = vadd.f32 %v821, %v826
      %v830 = vrot.slane %v829, 4
      %v831 = vadd.f32 %v829, %v830
      %v832 = vrot.slane %v831, 2
      %v833 = vadd.f32 %v831, %v832
      %v834 = vrot.slane %v833, 1
      %v835 = vadd.f32 %v833, %v834
      %v836 = vmul.f32 %v835, %v748
      %v837 = vadd.f32 %v836, 1e-05
      %v838 = vrsqrt.pop %v837
      %v839 = vmul.f32 %v838, %v664
      %v840 = vlaneseq
      %v841 = vshrl.u32 %v840, 7
      %v842 = vsub.s32 0, %v841
      %v843 = vrot.slane %v839, %v842
      %v844 = vmul.f32 %v750, %v843
      %v845 = vmul.f32 %v751, %v843
      %v847 = vlaneseq
      %v848 = vshrl.u32 %v847, 7
      %v849 = vsub.s32 0, %v848
      %v850 = vrot.slane %v665, %v849
      %v852 = vadd.f32 %v844, %v850
      %v853 = vadd.f32 %v845, %v850
      %v854 = vmax.f32 %v852, 0.0
      %v855 = vmax.f32 %v853, 0.0
      %v856 = vpack.c.bf16 %v855, %v854
      %v858 = vshrl.u32 %v856, 16
      %v860 = vrot.slane %v858, 7
      %v861 = vshll.u32 %v856, 16
      %v863 = vor.u32 %v860, %v861
      %v865 = vsel %vm336, 0, %v863
      %v866 = vld [vmem:[%s4] sm:$0xf]
      %v867 = vld [vmem:[%s4 + $0x4] sm:$0xf]
      %v868 = vld [vmem:[%s4 + $0x8] sm:$0xf]
      %v869 = vld [vmem:[%s4 + $0xc] sm:$0xf]
      %v870 = vld [vmem:[%s4 + $0x10] sm:$0xf]
      %v871 = vld [vmem:[%s4 + $0x14] sm:$0xf]
      %v872 = vld [vmem:[%s4 + $0x18] sm:$0xf]
      %v873 = vld [vmem:[%s4 + $0x1c] sm:$0xf]
      %v874 = vld [vmem:[%s4 + $0x20] sm:$0xf]
      %v875 = vld [vmem:[%s4 + $0x24] sm:$0xf]
      %v876 = vld [vmem:[%s4 + $0x28] sm:$0xf]
      %v877 = vld [vmem:[%s4 + $0x2c] sm:$0xf]
      %v878 = vld [vmem:[%s4 + $0x30] sm:$0xf]
      %v879 = vld [vmem:[%s4 + $0x34] sm:$0xf]
      %v880 = vld [vmem:[%s4 + $0x38] sm:$0xf]
      %v881 = vld [vmem:[%s4 + $0x3c] sm:$0xf]
      %s882 = scalar_lea.vmem %s4, 64
      %v883 = vld [vmem:[%s882] sm:$0xf]
      %v884 = vld [vmem:[%s882 + $0x4] sm:$0xf]
      %v885 = vld [vmem:[%s882 + $0x8] sm:$0xf]
      %v886 = vld [vmem:[%s882 + $0xc] sm:$0xf]
      %v887 = vld [vmem:[%s882 + $0x10] sm:$0xf]
      %v888 = vld [vmem:[%s882 + $0x14] sm:$0xf]
      %v889 = vld [vmem:[%s882 + $0x18] sm:$0xf]
      %v890 = vld [vmem:[%s882 + $0x1c] sm:$0xf]
      %v891 = vld [vmem:[%s882 + $0x20] sm:$0xf]
      %v892 = vld [vmem:[%s882 + $0x24] sm:$0xf]
      %v893 = vld [vmem:[%s882 + $0x28] sm:$0xf]
      %v894 = vld [vmem:[%s882 + $0x2c] sm:$0xf]
      %v895 = vld [vmem:[%s882 + $0x30] sm:$0xf]
      %v896 = vld [vmem:[%s882 + $0x34] sm:$0xf]
      %v897 = vld [vmem:[%s882 + $0x38] sm:$0xf]
      %v898 = vld [vmem:[%s882 + $0x3c] sm:$0xf]
      %v915 = vunpack.c.l.b16 %v883
      %v916 = vunpack.c.l.b16 %v884
      %v917 = vunpack.c.l.b16 %v885
      %v918 = vunpack.c.l.b16 %v886
      %v919 = vunpack.c.l.b16 %v887
      %v920 = vunpack.c.l.b16 %v888
      %v921 = vunpack.c.l.b16 %v889
      %v922 = vunpack.c.l.b16 %v890
      %v923 = vunpack.c.l.b16 %v891
      %v924 = vunpack.c.l.b16 %v892
      %v925 = vunpack.c.l.b16 %v893
      %v926 = vunpack.c.l.b16 %v894
      %v927 = vunpack.c.l.b16 %v895
      %v928 = vunpack.c.l.b16 %v896
      %v929 = vunpack.c.l.b16 %v897
      %v930 = vunpack.c.l.b16 %v898
      %v931 = vpack.c.b16 %v916, %v915
      %v932 = vpack.c.b16 %v918, %v917
      %v933 = vpack.c.b16 %v920, %v919
      %v934 = vpack.c.b16 %v922, %v921
      %v935 = vpack.c.b16 %v924, %v923
      %v936 = vpack.c.b16 %v926, %v925
      %v937 = vpack.c.b16 %v928, %v927
      %v938 = vpack.c.b16 %v930, %v929
      %947 = vmatprep.subr.bf16.mxu0 0
      %948 = vmatpush1.bf16.msra.mxu0 %v931
      %949 = vmatprep.subr.bf16.mxu0 0
      %950 = vmatpush1.bf16.msra.mxu0 %v932
      %951 = vmatprep.subr.bf16.mxu0 0
      %952 = vmatpush1.bf16.msra.mxu0 %v933
      %953 = vmatprep.subr.bf16.mxu0 0
      %954 = vmatpush1.bf16.msra.mxu0 %v934
      %955 = vmatprep.subr.bf16.mxu0 0
      %956 = vmatpush1.bf16.msra.mxu0 %v935
      %957 = vmatprep.subr.bf16.mxu0 0
      %958 = vmatpush1.bf16.msra.mxu0 %v936
      %959 = vmatprep.subr.bf16.mxu0 0
      %960 = vmatpush1.bf16.msra.mxu0 %v937
      %961 = vmatprep.subr.bf16.mxu0 0
      %962 = vmatpush1.bf16.msra.mxu0 %v938
      %963 = vmatprep.subr.bf16.mxu0 0
      %964 = vmatpush1.bf16.msra.mxu0 0
      %965 = vmatprep.subr.bf16.mxu0 0
      %966 = vmatpush1.bf16.msra.mxu0 0
      %967 = vmatprep.subr.bf16.mxu0 0
      %968 = vmatpush1.bf16.msra.mxu0 0
      %969 = vmatprep.subr.bf16.mxu0 0
      %970 = vmatpush1.bf16.msra.mxu0 0
      %971 = vmatprep.subr.bf16.mxu0 0
      %972 = vmatpush1.bf16.msra.mxu0 0
      %973 = vmatprep.subr.bf16.mxu0 0
      %974 = vmatpush1.bf16.msra.mxu0 0
      %975 = vmatprep.subr.bf16.mxu0 0
      %976 = vmatpush1.bf16.msra.mxu0 0
      %977 = vmatprep.subr.bf16.mxu0 0
      %978 = vmatpush1.bf16.msra.mxu0 0
      %979 = vmatprep.mubr.bf16.mxu0 0
      %980 = vmatmul.mubr.bf16.gmra.mrb[0].mxu0 %v856
      %v981 = vpop.f32.mrb[0].mxu0
      %v982 = vadd.f32 0.0, %v981
      %v983 = vpop.f32.mrb[0].mxu0
      %v984 = vpop.f32.mrb[0].mxu0
      %v985 = vadd.f32 0.0, %v984
      %v986 = vpop.f32.mrb[0].mxu0
      %987 = vdwg.mxu0
      %v1004 = vunpack.c.l.b16 %v866
      %v1005 = vunpack.c.l.b16 %v867
      %v1006 = vunpack.c.l.b16 %v868
      %v1007 = vunpack.c.l.b16 %v869
      %v1008 = vunpack.c.l.b16 %v870
      %v1009 = vunpack.c.l.b16 %v871
      %v1010 = vunpack.c.l.b16 %v872
      %v1011 = vunpack.c.l.b16 %v873
      %v1012 = vunpack.c.l.b16 %v874
      %v1013 = vunpack.c.l.b16 %v875
      %v1014 = vunpack.c.l.b16 %v876
      %v1015 = vunpack.c.l.b16 %v877
      %v1016 = vunpack.c.l.b16 %v878
      %v1017 = vunpack.c.l.b16 %v879
      %v1018 = vunpack.c.l.b16 %v880
      %v1019 = vunpack.c.l.b16 %v881
      %v1020 = vpack.c.b16 %v1005, %v1004
      %v1021 = vpack.c.b16 %v1007, %v1006
      %v1022 = vpack.c.b16 %v1009, %v1008
      %v1023 = vpack.c.b16 %v1011, %v1010
      %v1024 = vpack.c.b16 %v1013, %v1012
      %v1025 = vpack.c.b16 %v1015, %v1014
      %v1026 = vpack.c.b16 %v1017, %v1016
      %v1027 = vpack.c.b16 %v1019, %v1018
      %1036 = vmatprep.subr.bf16.mxu0 0
      %1037 = vmatpush1.bf16.msra.mxu0 %v1020
      %1038 = vmatprep.subr.bf16.mxu0 0
      %1039 = vmatpush1.bf16.msra.mxu0 %v1021
      %1040 = vmatprep.subr.bf16.mxu0 0
      %1041 = vmatpush1.bf16.msra.mxu0 %v1022
      %1042 = vmatprep.subr.bf16.mxu0 0
      %1043 = vmatpush1.bf16.msra.mxu0 %v1023
      %1044 = vmatprep.subr.bf16.mxu0 0
      %1045 = vmatpush1.bf16.msra.mxu0 %v1024
      %1046 = vmatprep.subr.bf16.mxu0 0
      %1047 = vmatpush1.bf16.msra.mxu0 %v1025
      %1048 = vmatprep.subr.bf16.mxu0 0
      %1049 = vmatpush1.bf16.msra.mxu0 %v1026
      %1050 = vmatprep.subr.bf16.mxu0 0
      %1051 = vmatpush1.bf16.msra.mxu0 %v1027
      %1052 = vmatprep.subr.bf16.mxu0 0
      %1053 = vmatpush1.bf16.msra.mxu0 0
      %1054 = vmatprep.subr.bf16.mxu0 0
      %1055 = vmatpush1.bf16.msra.mxu0 0
      %1056 = vmatprep.subr.bf16.mxu0 0
      %1057 = vmatpush1.bf16.msra.mxu0 0
      %1058 = vmatprep.subr.bf16.mxu0 0
      %1059 = vmatpush1.bf16.msra.mxu0 0
      %1060 = vmatprep.subr.bf16.mxu0 0
      %1061 = vmatpush1.bf16.msra.mxu0 0
      %1062 = vmatprep.subr.bf16.mxu0 0
      %1063 = vmatpush1.bf16.msra.mxu0 0
      %1064 = vmatprep.subr.bf16.mxu0 0
      %1065 = vmatpush1.bf16.msra.mxu0 0
      %1066 = vmatprep.subr.bf16.mxu0 0
      %1067 = vmatpush1.bf16.msra.mxu0 0
      %1068 = vmatprep.mubr.bf16.mxu0 0
      %1069 = vmatmul.mubr.bf16.gmra.mrb[0].mxu0 %v865
      %v1070 = vpop.f32.mrb[0].mxu0
      %v1071 = vadd.f32 %v982, %v1070
      %v1072 = vpop.f32.mrb[0].mxu0
      %v1073 = vpop.f32.mrb[0].mxu0
      %v1074 = vadd.f32 %v985, %v1073
      %v1075 = vpop.f32.mrb[0].mxu0
      %1076 = vdwg.mxu0
      %v1077 = vrot.slane %v861, 1
      %v1078 = vor.u32 %v858, %v1077
      %v1080 = vsel %vm554, %v1078, 0
      %s1081 = scalar_lea.vmem %s4, 128
      %v1082 = vld [vmem:[%s1081] sm:$0xf]
      %v1083 = vld [vmem:[%s1081 + $0x4] sm:$0xf]
      %v1084 = vld [vmem:[%s1081 + $0x8] sm:$0xf]
      %v1085 = vld [vmem:[%s1081 + $0xc] sm:$0xf]
      %v1086 = vld [vmem:[%s1081 + $0x10] sm:$0xf]
      %v1087 = vld [vmem:[%s1081 + $0x14] sm:$0xf]
      %v1088 = vld [vmem:[%s1081 + $0x18] sm:$0xf]
      %v1089 = vld [vmem:[%s1081 + $0x1c] sm:$0xf]
      %v1090 = vld [vmem:[%s1081 + $0x20] sm:$0xf]
      %v1091 = vld [vmem:[%s1081 + $0x24] sm:$0xf]
      %v1092 = vld [vmem:[%s1081 + $0x28] sm:$0xf]
      %v1093 = vld [vmem:[%s1081 + $0x2c] sm:$0xf]
      %v1094 = vld [vmem:[%s1081 + $0x30] sm:$0xf]
      %v1095 = vld [vmem:[%s1081 + $0x34] sm:$0xf]
      %v1096 = vld [vmem:[%s1081 + $0x38] sm:$0xf]
      %v1097 = vld [vmem:[%s1081 + $0x3c] sm:$0xf]
      %v1114 = vunpack.c.l.b16 %v1082
      %v1115 = vunpack.c.l.b16 %v1083
      %v1116 = vunpack.c.l.b16 %v1084
      %v1117 = vunpack.c.l.b16 %v1085
      %v1118 = vunpack.c.l.b16 %v1086
      %v1119 = vunpack.c.l.b16 %v1087
      %v1120 = vunpack.c.l.b16 %v1088
      %v1121 = vunpack.c.l.b16 %v1089
      %v1122 = vunpack.c.l.b16 %v1090
      %v1123 = vunpack.c.l.b16 %v1091
      %v1124 = vunpack.c.l.b16 %v1092
      %v1125 = vunpack.c.l.b16 %v1093
      %v1126 = vunpack.c.l.b16 %v1094
      %v1127 = vunpack.c.l.b16 %v1095
      %v1128 = vunpack.c.l.b16 %v1096
      %v1129 = vunpack.c.l.b16 %v1097
      %v1130 = vpack.c.b16 %v1115, %v1114
      %v1131 = vpack.c.b16 %v1117, %v1116
      %v1132 = vpack.c.b16 %v1119, %v1118
      %v1133 = vpack.c.b16 %v1121, %v1120
      %v1134 = vpack.c.b16 %v1123, %v1122
      %v1135 = vpack.c.b16 %v1125, %v1124
      %v1136 = vpack.c.b16 %v1127, %v1126
      %v1137 = vpack.c.b16 %v1129, %v1128
      %1146 = vmatprep.subr.bf16.mxu0 0
      %1147 = vmatpush1.bf16.msra.mxu0 %v1130
      %1148 = vmatprep.subr.bf16.mxu0 0
      %1149 = vmatpush1.bf16.msra.mxu0 %v1131
      %1150 = vmatprep.subr.bf16.mxu0 0
      %1151 = vmatpush1.bf16.msra.mxu0 %v1132
      %1152 = vmatprep.subr.bf16.mxu0 0
      %1153 = vmatpush1.bf16.msra.mxu0 %v1133
      %1154 = vmatprep.subr.bf16.mxu0 0
      %1155 = vmatpush1.bf16.msra.mxu0 %v1134
      %1156 = vmatprep.subr.bf16.mxu0 0
      %1157 = vmatpush1.bf16.msra.mxu0 %v1135
      %1158 = vmatprep.subr.bf16.mxu0 0
      %1159 = vmatpush1.bf16.msra.mxu0 %v1136
      %1160 = vmatprep.subr.bf16.mxu0 0
      %1161 = vmatpush1.bf16.msra.mxu0 %v1137
      %1162 = vmatprep.subr.bf16.mxu0 0
      %1163 = vmatpush1.bf16.msra.mxu0 0
      %1164 = vmatprep.subr.bf16.mxu0 0
      %1165 = vmatpush1.bf16.msra.mxu0 0
      %1166 = vmatprep.subr.bf16.mxu0 0
      %1167 = vmatpush1.bf16.msra.mxu0 0
      %1168 = vmatprep.subr.bf16.mxu0 0
      %1169 = vmatpush1.bf16.msra.mxu0 0
      %1170 = vmatprep.subr.bf16.mxu0 0
      %1171 = vmatpush1.bf16.msra.mxu0 0
      %1172 = vmatprep.subr.bf16.mxu0 0
      %1173 = vmatpush1.bf16.msra.mxu0 0
      %1174 = vmatprep.subr.bf16.mxu0 0
      %1175 = vmatpush1.bf16.msra.mxu0 0
      %1176 = vmatprep.subr.bf16.mxu0 0
      %1177 = vmatpush1.bf16.msra.mxu0 0
      %1178 = vmatprep.mubr.bf16.mxu0 0
      %1179 = vmatmul.mubr.bf16.gmra.mrb[0].mxu0 %v1080
      %v1180 = vpop.f32.mrb[0].mxu0
      %v1181 = vadd.f32 0.0, %v1180
      %v1182 = vpop.f32.mrb[0].mxu0
      %v1183 = vpop.f32.mrb[0].mxu0
      %v1184 = vadd.f32 0.0, %v1183
      %v1185 = vpop.f32.mrb[0].mxu0
      %1186 = vdwg.mxu0
      %v1187 = vadd.f32 %v1071, %v1181
      %v1188 = vadd.f32 %v1074, %v1184
      %v1189 = vld [vmem:[%s5] sm:$0x1]
      %v1190 = vld [vmem:[%s6] sm:$0x1]
      %1191 = vmatprep.subr.mxu0 0.0
      %1192 = vmatpush1.msra.mxu0 %v309
      %1193 = vmatprep.subr.mxu0 0.0
      %1194 = vmatpush1.msra.mxu0 %v310
      %1195 = vmatprep.subr.mxu0 0.0
      %1196 = vmatpush1.msra.mxu0 %v311
      %1197 = vmatprep.subr.mxu0 0.0
      %1198 = vmatpush1.msra.mxu0 %v312
      %1199 = vmatprep.subr.mxu0 0.0
      %1200 = vmatpush1.msra.mxu0 %v313
      %1201 = vmatprep.subr.mxu0 0.0
      %1202 = vmatpush1.msra.mxu0 %v314
      %1203 = vmatprep.subr.mxu0 0.0
      %1204 = vmatpush1.msra.mxu0 %v315
      %1205 = vmatprep.subr.mxu0 0.0
      %1206 = vmatpush1.msra.mxu0 %v316
      %1207 = vmatprep.subr.mxu0 0.0
      %1208 = vmatpush1.msra.mxu0 %v317
      %1209 = vmatprep.subr.mxu0 0.0
      %1210 = vmatpush1.msra.mxu0 %v318
      %1211 = vmatprep.subr.mxu0 0.0
      %1212 = vmatpush1.msra.mxu0 %v319
      %1213 = vmatprep.subr.mxu0 0.0
      %1214 = vmatpush1.msra.mxu0 %v320
      %1215 = vmatprep.subr.mxu0 0.0
      %1216 = vmatpush1.msra.mxu0 %v321
      %1217 = vmatprep.subr.mxu0 0.0
      %1218 = vmatpush1.msra.mxu0 %v322
      %1219 = vmatprep.subr.mxu0 0.0
      %1220 = vmatpush1.msra.mxu0 %v323
      %1221 = vmatprep.subr.mxu0 0.0
      %1222 = vmatpush1.msra.mxu0 %v324
      %1223 = vmatprep.subr.mxu0 0.0
      %1224 = vmatpush1.msra.mxu0 0.0
      %1225 = vmatprep.subr.mxu0 0.0
      %1226 = vmatpush1.msra.mxu0 0.0
      %1227 = vmatprep.subr.mxu0 0.0
      %1228 = vmatpush1.msra.mxu0 0.0
      %1229 = vmatprep.subr.mxu0 0.0
      %1230 = vmatpush1.msra.mxu0 0.0
      %1231 = vmatprep.subr.mxu0 0.0
      %1232 = vmatpush1.msra.mxu0 0.0
      %1233 = vmatprep.subr.mxu0 0.0
      %1234 = vmatpush1.msra.mxu0 0.0
      %1235 = vmatprep.subr.mxu0 0.0
      %1236 = vmatpush1.msra.mxu0 0.0
      %1237 = vmatprep.subr.mxu0 0.0
      %1238 = vmatpush1.msra.mxu0 0.0
      %1239 = vmatprep.subr.mxu0 0.0
      %1240 = vmatpush1.msra.mxu0 0.0
      %1241 = vmatprep.subr.mxu0 0.0
      %1242 = vmatpush1.msra.mxu0 0.0
      %1243 = vmatprep.subr.mxu0 0.0
      %1244 = vmatpush1.msra.mxu0 0.0
      %1245 = vmatprep.subr.mxu0 0.0
      %1246 = vmatpush1.msra.mxu0 0.0
      %1247 = vmatprep.subr.mxu0 0.0
      %1248 = vmatpush1.msra.mxu0 0.0
      %1249 = vmatprep.subr.mxu0 0.0
      %1250 = vmatpush1.msra.mxu0 0.0
      %1251 = vmatprep.subr.mxu0 0.0
      %1252 = vmatpush1.msra.mxu0 0.0
      %1253 = vmatprep.subr.mxu0 0.0
      %1254 = vmatpush1.msra.mxu0 0.0
      %1255 = vmatprep.mubr.f32.mxu0 0.0
      %1256 = vmatmul.mubr.f32.gmra.mrb[0].mxu0 %v1187
      %v1257 = vpop.f32.mrb[0].mxu0
      %v1258 = vadd.f32 0.0, %v1257
      %v1259 = vpop.f32.mrb[0].mxu0
      %1260 = vmatprep.mubr.f32.mxu0 0.0
      %1261 = vmatmul.mubr.f32.gmra.mrb[0].mxu0 %v1188
      %v1262 = vpop.f32.mrb[0].mxu0
      %v1263 = vadd.f32 0.0, %v1262
      %v1264 = vpop.f32.mrb[0].mxu0
      %1265 = vdwg.mxu0
      %v1266 = vadd.f32 %v1258, %v1263
      %v1267 = vrot.slane %v1266, 4
      %v1268 = vadd.f32 %v1266, %v1267
      %v1269 = vrot.slane %v1268, 2
      %v1270 = vadd.f32 %v1268, %v1269
      %v1271 = vrot.slane %v1270, 1
      %v1272 = vadd.f32 %v1270, %v1271
      %v1273 = vmul.f32 %v1272, %v748
      %v1274 = vsub.f32 %v1187, %v1273
      %v1275 = vsub.f32 %v1188, %v1273
      %v1276 = vmul.f32 %v1274, %v1274
      %v1277 = vmul.f32 %v1275, %v1275
      %1278 = vmatprep.subr.mxu0 0.0
      %1279 = vmatpush1.msra.mxu0 %v309
      %1280 = vmatprep.subr.mxu0 0.0
      %1281 = vmatpush1.msra.mxu0 %v310
      %1282 = vmatprep.subr.mxu0 0.0
      %1283 = vmatpush1.msra.mxu0 %v311
      %1284 = vmatprep.subr.mxu0 0.0
      %1285 = vmatpush1.msra.mxu0 %v312
      %1286 = vmatprep.subr.mxu0 0.0
      %1287 = vmatpush1.msra.mxu0 %v313
      %1288 = vmatprep.subr.mxu0 0.0
      %1289 = vmatpush1.msra.mxu0 %v314
      %1290 = vmatprep.subr.mxu0 0.0
      %1291 = vmatpush1.msra.mxu0 %v315
      %1292 = vmatprep.subr.mxu0 0.0
      %1293 = vmatpush1.msra.mxu0 %v316
      %1294 = vmatprep.subr.mxu0 0.0
      %1295 = vmatpush1.msra.mxu0 %v317
      %1296 = vmatprep.subr.mxu0 0.0
      %1297 = vmatpush1.msra.mxu0 %v318
      %1298 = vmatprep.subr.mxu0 0.0
      %1299 = vmatpush1.msra.mxu0 %v319
      %1300 = vmatprep.subr.mxu0 0.0
      %1301 = vmatpush1.msra.mxu0 %v320
      %1302 = vmatprep.subr.mxu0 0.0
      %1303 = vmatpush1.msra.mxu0 %v321
      %1304 = vmatprep.subr.mxu0 0.0
      %1305 = vmatpush1.msra.mxu0 %v322
      %1306 = vmatprep.subr.mxu0 0.0
      %1307 = vmatpush1.msra.mxu0 %v323
      %1308 = vmatprep.subr.mxu0 0.0
      %1309 = vmatpush1.msra.mxu0 %v324
      %1310 = vmatprep.subr.mxu0 0.0
      %1311 = vmatpush1.msra.mxu0 0.0
      %1312 = vmatprep.subr.mxu0 0.0
      %1313 = vmatpush1.msra.mxu0 0.0
      %1314 = vmatprep.subr.mxu0 0.0
      %1315 = vmatpush1.msra.mxu0 0.0
      %1316 = vmatprep.subr.mxu0 0.0
      %1317 = vmatpush1.msra.mxu0 0.0
      %1318 = vmatprep.subr.mxu0 0.0
      %1319 = vmatpush1.msra.mxu0 0.0
      %1320 = vmatprep.subr.mxu0 0.0
      %1321 = vmatpush1.msra.mxu0 0.0
      %1322 = vmatprep.subr.mxu0 0.0
      %1323 = vmatpush1.msra.mxu0 0.0
      %1324 = vmatprep.subr.mxu0 0.0
      %1325 = vmatpush1.msra.mxu0 0.0
      %1326 = vmatprep.subr.mxu0 0.0
      %1327 = vmatpush1.msra.mxu0 0.0
      %1328 = vmatprep.subr.mxu0 0.0
      %1329 = vmatpush1.msra.mxu0 0.0
      %1330 = vmatprep.subr.mxu0 0.0
      %1331 = vmatpush1.msra.mxu0 0.0
      %1332 = vmatprep.subr.mxu0 0.0
      %1333 = vmatpush1.msra.mxu0 0.0
      %1334 = vmatprep.subr.mxu0 0.0
      %1335 = vmatpush1.msra.mxu0 0.0
      %1336 = vmatprep.subr.mxu0 0.0
      %1337 = vmatpush1.msra.mxu0 0.0
      %1338 = vmatprep.subr.mxu0 0.0
      %1339 = vmatpush1.msra.mxu0 0.0
      %1340 = vmatprep.subr.mxu0 0.0
      %1341 = vmatpush1.msra.mxu0 0.0
      %1342 = vmatprep.mubr.f32.mxu0 0.0
      %1343 = vmatmul.mubr.f32.gmra.mrb[0].mxu0 %v1276
      %v1344 = vpop.f32.mrb[0].mxu0
      %v1345 = vadd.f32 0.0, %v1344
      %v1346 = vpop.f32.mrb[0].mxu0
      %1347 = vmatprep.mubr.f32.mxu0 0.0
      %1348 = vmatmul.mubr.f32.gmra.mrb[0].mxu0 %v1277
      %v1349 = vpop.f32.mrb[0].mxu0
      %v1350 = vadd.f32 0.0, %v1349
      %v1351 = vpop.f32.mrb[0].mxu0
      %1352 = vdwg.mxu0
      %v1353 = vadd.f32 %v1345, %v1350
      %v1354 = vrot.slane %v1353, 4
      %v1355 = vadd.f32 %v1353, %v1354
      %v1356 = vrot.slane %v1355, 2
      %v1357 = vadd.f32 %v1355, %v1356
      %v1358 = vrot.slane %v1357, 1
      %v1359 = vadd.f32 %v1357, %v1358
      %v1360 = vmul.f32 %v1359, %v748
      %v1361 = vadd.f32 %v1360, 1e-05
      %v1362 = vrsqrt.pop %v1361
      %v1363 = vmul.f32 %v1362, %v1189
      %v1364 = vlaneseq
      %v1365 = vshrl.u32 %v1364, 7
      %v1366 = vsub.s32 0, %v1365
      %v1367 = vrot.slane %v1363, %v1366
      %v1368 = vmul.f32 %v1274, %v1367
      %v1369 = vmul.f32 %v1275, %v1367
      %v1371 = vlaneseq
      %v1372 = vshrl.u32 %v1371, 7
      %v1373 = vsub.s32 0, %v1372
      %v1374 = vrot.slane %v1190, %v1373
      %v1376 = vadd.f32 %v1368, %v1374
      %v1377 = vadd.f32 %v1369, %v1374
      %v1378 = vadd.f32 %v307, %v1376
      %v1379 = vadd.f32 %v308, %v1377
      %1380 = vst [vmem:[%s305] sm:$0xff] %v1378
      %1381 = vst [vmem:[%s305 + $0x8] sm:$0xff] %v1379
      %p1382 = scmp.lt.s32.totalorder %s19, 1
      %s1383 = scalar_select %p1382, %s19, 1
      %s1384 = smul.addr %s1383, 2
      %s1385 = smul.addr %s1384, 8
      %s1386 = scalar_lea.vmem %s8, %s1385
      // Predicated region
      $region53: #{residual_block.1} parent=51 // pred_check
        %p1387 = pneg %p210
      $region54: #{residual_block.1} parent=51 // pred_check_branch
        %1389 = sbr.rel (%p1387) target = $region56
      $region55: #{residual_block.1} parent=51 // pred_region
        _
      $region56: #{residual_block.1} parent=51 // pred_fallthru
        _
    $region52: #{residual_block.1} parent=5 // pred_fallthru
      _
    %p1390 = scmp.le.s32.totalorder 2, %s14
    // Predicated region
    $region57: #{residual_block.1} parent=5 // pred_check
      %p1391 = pneg %p1390
    $region58: #{residual_block.1} parent=5 // pred_check_branch
      %1393 = sbr.rel (%p1391) target = $region60
    $region59: #{residual_block.1} parent=5 // pred_region
      %s1394 = ssub.s32 %s14, 2
      // Predicated region
      $region61: #{residual_block.1} parent=59 // pred_check
        %p1395 = pneg %p216
      $region62: #{residual_block.1} parent=59 // pred_check_branch
        %1397 = sbr.rel (%p1395) target = $region64
      $region63: #{residual_block.1} parent=59 // pred_region
        %p1398 = scmp.lt.s32.totalorder %s20, 1
        %s1399 = scalar_select %p1398, %s20, 1
        %s1400 = smul.addr %s1399, 2
        %s1401 = smul.addr %s1400, 8
        %s1402 = scalar_lea.vmem %s8, %s1401
      $region64: #{residual_block.1} parent=59 // pred_fallthru
        _
    $region60: #{residual_block.1} parent=5 // pred_fallthru
      _
  $region6: #{residual_block.1} parent=0 // loop_footer
    %s18 = sadd.s32 1, %s14
  $region7: #{residual_block.1} parent=0 // loop_footer_branch
    %13 = sbr.rel target = $region3
  $region8: #{residual_block.1} parent=0 // loop_exit
    _

</llo_original>
